<compile_context>
chip_gen: v7x
topology: tpu7x:2x2x1
jax: 0.10.0
libtpu: 0.0.40
codegen_flags: <defaults>
</compile_context>

<pallas_src>
import math

import jax
import jax.numpy as jnp
import numpy as np
from jax import lax
from jax.experimental import pallas as pl
from jax.experimental.pallas import tpu as pltpu

# ---- small GemmaConfig-consistent sizes ----
B, S = 2, 8
HIDDEN = 32
NUM_HEADS = 4
NUM_KV_HEADS = 2
HEAD_DIM = 16
INTER = 64
RMS_EPS = 1e-6
ROPE_THETA = 10000.0
KV_GROUPS = NUM_HEADS // NUM_KV_HEADS
Q_DIM = NUM_HEADS * HEAD_DIM           # 64
QKV_COLS = 5 * Q_DIM                   # 320 = [ q | q_rot | k_rep | k_rot_rep | v_rep ]
GELU_C = 0.7978845608028654            # sqrt(2/pi)
ATTN_SCALE = 1.0 / math.sqrt(HEAD_DIM)


# ---------------- fused decoder-layer kernel (one batch per grid step) ----------------
def decoder_layer_kernel(x_ref, in_scale_ref, post_scale_ref, wqkv_ref, wo_ref,
                         wgu_ref, bgu_ref, wd_ref, bd_ref, cos_ref, sin_ref,
                         mask_ref, o_ref):
    x = x_ref[...].astype(jnp.float32)                            # [S, H]

    # ---- input RMSNorm ((1 + w) pre-folded into in_scale) ----
    normed = x * lax.rsqrt(jnp.mean(x * x, axis=-1, keepdims=True) + RMS_EPS)
    normed = normed * in_scale_ref[...]

    # ---- single fused lane-dense projection: [S, 32] @ [32, 320] ----
    # columns: [ q*scale | rotate_half(q)*scale | k (kv-repeated) | rotate_half(k) (kv-rep) | v (kv-rep) ]
    big = jnp.dot(normed, wqkv_ref[...], preferred_element_type=jnp.float32)

    cos = cos_ref[...]                                            # [S, 64] per-head tiled
    sin = sin_ref[...]
    # RoPE as pure element-wise FMAs (rotate-half + sign live in the weight columns).
    q = big[:, 0:Q_DIM] * cos + big[:, Q_DIM:2 * Q_DIM] * sin     # [S, 64]
    k = big[:, 2 * Q_DIM:3 * Q_DIM] * cos + big[:, 3 * Q_DIM:4 * Q_DIM] * sin
    v = big[:, 4 * Q_DIM:5 * Q_DIM]

    mask = mask_ref[0]                                            # [S, S] additive mask

    # ---- attention + distributed o_proj accumulation (no concatenations) ----
    h1 = x                                                        # residual accumulator [S, H]
    for h in range(NUM_HEADS):
        c0 = h * HEAD_DIM
        qh = q[:, c0:c0 + HEAD_DIM]
        kh = k[:, c0:c0 + HEAD_DIM]
        vh = v[:, c0:c0 + HEAD_DIM]
        # q @ k^T without materializing a transpose (1/sqrt(hd) already folded into wq)
        sc = lax.dot_general(qh, kh, (((1,), (1,)), ((), ())),
                             preferred_element_type=jnp.float32)  # [S, S]
        sc = sc + mask
        m = jnp.max(sc, axis=-1, keepdims=True)
        p = jnp.exp(sc - m)
        p = p * pl.reciprocal(jnp.sum(p, axis=-1, keepdims=True), approx=True)  # EUP slot
        ah = jnp.dot(p, vh, preferred_element_type=jnp.float32)                 # [S, hd]
        # distributed o_proj: accumulate attn_h @ Wo_h straight into the residual
        h1 = h1 + jnp.dot(ah, wo_ref[c0:c0 + HEAD_DIM, :],
                          preferred_element_type=jnp.float32)

    # ---- post-attention RMSNorm fused into MLP ((1 + w) pre-folded) ----
    n2 = h1 * lax.rsqrt(jnp.mean(h1 * h1, axis=-1, keepdims=True) + RMS_EPS)
    n2 = n2 * post_scale_ref[...]

    # ---- fused gate+up projection: [S, 32] @ [32, 128] (lane dense) ----
    gu = jnp.dot(n2, wgu_ref[...], preferred_element_type=jnp.float32) + bgu_ref[...]
    g = gu[:, :INTER]
    u = gu[:, INTER:]
    # gelu(approximate='tanh') on the gate only
    g_act = 0.5 * g * (1.0 + jnp.tanh(GELU_C * (g + 0.044715 * g * g * g)))

    # ---- down projection + residual ----
    out = jnp.dot(g_act * u, wd_ref[...], preferred_element_type=jnp.float32)
    out = out + bd_ref[...] + h1
    o_ref[...] = out.astype(o_ref.dtype)


# ---------------- wrapper-side weight folding ----------------
def _rotate_half_matrix():
    """P such that (x @ P) == rotate_half(x) for a single head (sign included)."""
    half = HEAD_DIM // 2
    p = np.zeros((HEAD_DIM, HEAD_DIM), dtype=np.float32)
    idx = np.arange(half)
    p[idx + half, idx] = -1.0          # out[:, :half] = -x[:, half:]
    p[idx, idx + half] = 1.0           # out[:, half:] =  x[:, :half]
    return jnp.asarray(p)


def _prep_fused_weights(params):
    P = _rotate_half_matrix()

    def rot_cols(w, n_heads):          # per-head (w_h @ P), [H, n*hd]
        w3 = w.reshape(HIDDEN, n_heads, HEAD_DIM)
        return jnp.einsum("hnd,de->hne", w3, P).reshape(HIDDEN, n_heads * HEAD_DIM)

    def rep_kv_cols(w):                # repeat_kv folded into columns: [H, NKV*hd] -> [H, NH*hd]
        w3 = w.reshape(HIDDEN, NUM_KV_HEADS, HEAD_DIM)
        return jnp.repeat(w3, KV_GROUPS, axis=1).reshape(HIDDEN, Q_DIM)

    wq_s = params["wq_t"] * ATTN_SCALE                      # fold attention scale into q
    wqkv = jnp.concatenate(
        [wq_s,
         rot_cols(wq_s, NUM_HEADS),
         rep_kv_cols(params["wk_t"]),
         rep_kv_cols(rot_cols(params["wk_t"], NUM_KV_HEADS)),
         rep_kv_cols(params["wv_t"])], axis=1)              # [H, 320]

    wgu = jnp.concatenate([params["wg_t"], params["wu_t"]], axis=1)   # [H, 128]
    bgu = jnp.concatenate([params["bg"], params["bu"]], axis=1)       # [1, 128]
    in_scale = 1.0 + params["input_ln_w"]                             # fold (1 + w)
    post_scale = 1.0 + params["post_ln_w"]
    return wqkv, wgu, bgu, in_scale, post_scale


# ---------------- full decoder layer forward ----------------
def gemma_decoder_layer(params, hidden_states, position_ids, attention_mask):
    b, s, hdim = hidden_states.shape
    x2d = hidden_states.reshape(b * s, hdim)

    # GemmaRotaryEmbedding tables, pre-tiled to the per-head column layout.
    inv_freq = 1.0 / (ROPE_THETA ** (jnp.arange(0, HEAD_DIM, 2, dtype=jnp.float32)
                                     / HEAD_DIM))
    freqs = position_ids.astype(jnp.float32)[:, :, None] * inv_freq[None, None, :]
    emb = jnp.concatenate([freqs, freqs], axis=-1)                    # [B, S, hd]
    cos64 = jnp.tile(jnp.cos(emb), (1, 1, NUM_HEADS)).reshape(b * s, Q_DIM)
    sin64 = jnp.tile(jnp.sin(emb), (1, 1, NUM_HEADS)).reshape(b * s, Q_DIM)

    wqkv, wgu, bgu, in_scale, post_scale = _prep_fused_weights(params)

    mask3d = attention_mask[:, 0]                                     # [B, S, S]
    # TODO(synk): head-dependent attention masks are not supported (head dim of the
    # mask is assumed broadcast); the causal/padding mask used here is head-invariant.

    grid_spec = pltpu.PrefetchScalarGridSpec(
        num_scalar_prefetch=0,
        grid=(b,),                                     # one batch per grid step (v7x: one per TC)
        in_specs=[
            pl.BlockSpec((S, HIDDEN), lambda i: (i, 0)),          # x rows of this batch
            pl.BlockSpec((1, HIDDEN), lambda i: (0, 0)),          # 1 + input_ln_w
            pl.BlockSpec((1, HIDDEN), lambda i: (0, 0)),          # 1 + post_ln_w
            pl.BlockSpec((HIDDEN, QKV_COLS), lambda i: (0, 0)),   # fused qkv(+rot,+rep) weight
            pl.BlockSpec((Q_DIM, HIDDEN), lambda i: (0, 0)),      # o_proj weight
            pl.BlockSpec((HIDDEN, 2 * INTER), lambda i: (0, 0)),  # gate|up weight
            pl.BlockSpec((1, 2 * INTER), lambda i: (0, 0)),       # gate|up bias
            pl.BlockSpec((INTER, HIDDEN), lambda i: (0, 0)),      # down weight
            pl.BlockSpec((1, HIDDEN), lambda i: (0, 0)),          # down bias
            pl.BlockSpec((S, Q_DIM), lambda i: (i, 0)),           # cos (per-head tiled)
            pl.BlockSpec((S, Q_DIM), lambda i: (i, 0)),           # sin (per-head tiled)
            pl.BlockSpec((1, S, S), lambda i: (i, 0, 0)),         # additive mask
        ],
        out_specs=pl.BlockSpec((S, HIDDEN), lambda i: (i, 0)),
    )

    out2d = pl.pallas_call(
        decoder_layer_kernel,
        out_shape=jax.ShapeDtypeStruct((b * s, hdim), hidden_states.dtype),
        grid_spec=grid_spec,
        compiler_params=pltpu.CompilerParams(dimension_semantics=("parallel",)),
    )(x2d, in_scale, post_scale, wqkv, params["wo_t"], wgu, bgu,
      params["wd_t"], params["bd"], cos64, sin64, mask3d)
    return out2d.reshape(b, s, hdim)
    # TODO(synk): KVCache update / decode-step concat is stateful Python and is not
    # expressed here (prefill kv_cache=None path only); attention_dropout=0.0 -> no-op.


# ---------------- pure-JAX reference (for correctness check) ----------------
def reference(params, hidden_states, position_ids, attention_mask):
    def rms(x, w):
        xf = x.astype(jnp.float32)
        var = jnp.mean(xf * xf, axis=-1, keepdims=True)
        return (xf * lax.rsqrt(var + RMS_EPS)) * (1.0 + w.reshape(-1))

    def rotate_half(x):
        h = x.shape[-1] // 2
        return jnp.concatenate([-x[..., h:], x[..., :h]], axis=-1)

    x = hidden_states
    res = x
    hs = rms(x, params["input_ln_w"])
    q = hs @ params["wq_t"]
    k = hs @ params["wk_t"]
    v = hs @ params["wv_t"]
    q = q.reshape(B, S, NUM_HEADS, HEAD_DIM).transpose(0, 2, 1, 3)
    k = k.reshape(B, S, NUM_KV_HEADS, HEAD_DIM).transpose(0, 2, 1, 3)
    v = v.reshape(B, S, NUM_KV_HEADS, HEAD_DIM).transpose(0, 2, 1, 3)

    inv_freq = 1.0 / (ROPE_THETA ** (jnp.arange(0, HEAD_DIM, 2, dtype=jnp.float32)
                                     / HEAD_DIM))
    freqs = position_ids.astype(jnp.float32)[:, :, None] * inv_freq[None, None, :]
    emb = jnp.concatenate([freqs, freqs], axis=-1)
    cos, sin = jnp.cos(emb)[:, None], jnp.sin(emb)[:, None]
    q = q * cos + rotate_half(q) * sin
    k = k * cos + rotate_half(k) * sin

    k = jnp.repeat(k, KV_GROUPS, axis=1)
    v = jnp.repeat(v, KV_GROUPS, axis=1)
    scores = jnp.einsum("bhqd,bhkd->bhqk", q, k) / math.sqrt(HEAD_DIM)
    scores = scores + attention_mask
    p = jax.nn.softmax(scores.astype(jnp.float32), axis=-1)
    attn = jnp.einsum("bhqk,bhkd->bhqd", p, v)
    attn = attn.transpose(0, 2, 1, 3).reshape(B, S, NUM_HEADS * HEAD_DIM)
    hs = attn @ params["wo_t"] + res

    res = hs
    hs2 = rms(hs, params["post_ln_w"])
    g = jax.nn.gelu(hs2 @ params["wg_t"] + params["bg"], approximate=True)
    u = hs2 @ params["wu_t"] + params["bu"]
    out = (g * u) @ params["wd_t"] + params["bd"] + res
    return out


def init_params(key):
    ks = jax.random.split(key, 12)

    def w(k, shape, scale=0.05):
        return jax.random.normal(k, shape, dtype=jnp.float32) * scale

    return {
        "input_ln_w": w(ks[0], (1, HIDDEN), 0.1),
        "post_ln_w": w(ks[1], (1, HIDDEN), 0.1),
        "wq_t": w(ks[2], (HIDDEN, NUM_HEADS * HEAD_DIM)),
        "wk_t": w(ks[3], (HIDDEN, NUM_KV_HEADS * HEAD_DIM)),
        "wv_t": w(ks[4], (HIDDEN, NUM_KV_HEADS * HEAD_DIM)),
        "wo_t": w(ks[5], (NUM_HEADS * HEAD_DIM, HIDDEN)),
        "wg_t": w(ks[6], (HIDDEN, INTER)),
        "bg": w(ks[7], (1, INTER), 0.01),
        "wu_t": w(ks[8], (HIDDEN, INTER)),
        "bu": w(ks[9], (1, INTER), 0.01),
        "wd_t": w(ks[10], (INTER, HIDDEN)),
        "bd": w(ks[11], (1, HIDDEN), 0.01),
    }


if __name__ == "__main__":
    key = jax.random.PRNGKey(0)
    kp, kx = jax.random.split(key)
    params = init_params(kp)

    hidden_states = jax.random.normal(kx, (B, S, HIDDEN), dtype=jnp.float32)
    position_ids = jnp.broadcast_to(jnp.arange(S, dtype=jnp.int32)[None, :], (B, S))

    causal = jnp.tril(jnp.ones((S, S), dtype=bool))
    attention_mask = jnp.where(causal, 0.0, -1e9).astype(jnp.float32)
    attention_mask = jnp.broadcast_to(attention_mask[None, None], (B, 1, S, S))

    fwd = jax.jit(gemma_decoder_layer)
    out = fwd(params, hidden_states, position_ids, attention_mask)
    out = jax.block_until_ready(out)

    ref = reference(params, hidden_states, position_ids, attention_mask)
    np.testing.assert_allclose(np.asarray(out), np.asarray(ref), rtol=2e-3, atol=2e-3)

    print("KERNEL_OK")
</pallas_src>

<mosaic_0001>
module attributes {stable_mosaic.version = 11 : i64} {
  func.func @decoder_layer_kernel(%arg0: i32, %arg1: memref<8x32xf32, #tpu.memory_space<vmem>>, %arg2: memref<1x32xf32, #tpu.memory_space<vmem>>, %arg3: memref<1x32xf32, #tpu.memory_space<vmem>>, %arg4: memref<32x320xf32, #tpu.memory_space<vmem>>, %arg5: memref<64x32xf32, #tpu.memory_space<vmem>>, %arg6: memref<32x128xf32, #tpu.memory_space<vmem>>, %arg7: memref<1x128xf32, #tpu.memory_space<vmem>>, %arg8: memref<64x32xf32, #tpu.memory_space<vmem>>, %arg9: memref<1x32xf32, #tpu.memory_space<vmem>>, %arg10: memref<8x64xf32, #tpu.memory_space<vmem>>, %arg11: memref<8x64xf32, #tpu.memory_space<vmem>>, %arg12: memref<1x8x8xf32, #tpu.memory_space<vmem>>, %arg13: memref<8x32xf32, #tpu.memory_space<vmem>>) attributes {dimension_semantics = [#tpu.dimension_semantics<parallel>], iteration_bounds = array<i64: 2>, scalar_prefetch = 0 : i64, scratch_operands = 0 : i64, tpu.core_type = #tpu.core_type<tc>, window_params = [{transform_indices = @transform_0, window_bounds = array<i64: 8, 32>}, {pipeline_mode = #tpu.pipeline_mode<synchronous>, transform_indices = @transform_1, window_bounds = array<i64: 1, 32>}, {pipeline_mode = #tpu.pipeline_mode<synchronous>, transform_indices = @transform_2, window_bounds = array<i64: 1, 32>}, {pipeline_mode = #tpu.pipeline_mode<synchronous>, transform_indices = @transform_3, window_bounds = array<i64: 32, 320>}, {pipeline_mode = #tpu.pipeline_mode<synchronous>, transform_indices = @transform_4, window_bounds = array<i64: 64, 32>}, {pipeline_mode = #tpu.pipeline_mode<synchronous>, transform_indices = @transform_5, window_bounds = array<i64: 32, 128>}, {pipeline_mode = #tpu.pipeline_mode<synchronous>, transform_indices = @transform_6, window_bounds = array<i64: 1, 128>}, {pipeline_mode = #tpu.pipeline_mode<synchronous>, transform_indices = @transform_7, window_bounds = array<i64: 64, 32>}, {pipeline_mode = #tpu.pipeline_mode<synchronous>, transform_indices = @transform_8, window_bounds = array<i64: 1, 32>}, {transform_indices = @transform_9, window_bounds = array<i64: 8, 64>}, {transform_indices = @transform_10, window_bounds = array<i64: 8, 64>}, {transform_indices = @transform_11, window_bounds = array<i64: 1, 8, 8>}, {transform_indices = @transform_12, window_bounds = array<i64: 8, 32>}]} {
    %c0 = arith.constant 0 : index
    %c0_0 = arith.constant 0 : index
    %0 = vector.load %arg1[%c0, %c0_0] : memref<8x32xf32, #tpu.memory_space<vmem>>, vector<8x32xf32>
    %1 = arith.mulf %0, %0 : vector<8x32xf32>
    %cst = arith.constant dense<0.000000e+00> : vector<8xf32>
    %2 = vector.multi_reduction <add>, %1, %cst [1] : vector<8x32xf32> to vector<8xf32>
    %3 = vector.shape_cast %2 : vector<8xf32> to vector<8x1xf32>
    %cst_1 = arith.constant 3.200000e+01 : f32
    %4 = vector.broadcast %cst_1 : f32 to vector<8x1xf32>
    %5 = arith.divf %3, %4 : vector<8x1xf32>
    %cst_2 = arith.constant 9.99999997E-7 : f32
    %6 = vector.broadcast %cst_2 : f32 to vector<8x1xf32>
    %7 = arith.addf %5, %6 : vector<8x1xf32>
    %8 = math.rsqrt %7 : vector<8x1xf32>
    %9 = vector.broadcast %8 : vector<8x1xf32> to vector<8x32xf32>
    %10 = arith.mulf %0, %9 : vector<8x32xf32>
    %c0_3 = arith.constant 0 : index
    %c0_4 = arith.constant 0 : index
    %11 = vector.load %arg2[%c0_3, %c0_4] : memref<1x32xf32, #tpu.memory_space<vmem>>, vector<1x32xf32>
    %12 = vector.broadcast %11 : vector<1x32xf32> to vector<8x32xf32>
    %13 = arith.mulf %10, %12 : vector<8x32xf32>
    %c0_5 = arith.constant 0 : index
    %c0_6 = arith.constant 0 : index
    %14 = vector.load %arg4[%c0_5, %c0_6] : memref<32x320xf32, #tpu.memory_space<vmem>>, vector<32x320xf32>
    %cst_7 = arith.constant dense<0.000000e+00> : vector<8x320xf32>
    %15 = tpu.matmul %13, %14, %cst_7 {dimension_numbers = #tpu.dot_dimension_numbers<[1], [0], [0], [1], [0, 0, 1, 1], [], []>} : vector<8x32xf32>, vector<32x320xf32>, vector<8x320xf32> -> vector<8x320xf32>
    %c0_8 = arith.constant 0 : index
    %c0_9 = arith.constant 0 : index
    %16 = vector.load %arg10[%c0_8, %c0_9] : memref<8x64xf32, #tpu.memory_space<vmem>>, vector<8x64xf32>
    %c0_10 = arith.constant 0 : index
    %c0_11 = arith.constant 0 : index
    %17 = vector.load %arg11[%c0_10, %c0_11] : memref<8x64xf32, #tpu.memory_space<vmem>>, vector<8x64xf32>
    %18 = vector.extract_strided_slice %15 {offsets = [0, 0], sizes = [8, 64], strides = [1, 1]} : vector<8x320xf32> to vector<8x64xf32>
    %19 = arith.mulf %18, %16 : vector<8x64xf32>
    %20 = vector.extract_strided_slice %15 {offsets = [0, 64], sizes = [8, 64], strides = [1, 1]} : vector<8x320xf32> to vector<8x64xf32>
    %21 = arith.mulf %20, %17 : vector<8x64xf32>
    %22 = arith.addf %19, %21 : vector<8x64xf32>
    %23 = vector.extract_strided_slice %15 {offsets = [0, 128], sizes = [8, 64], strides = [1, 1]} : vector<8x320xf32> to vector<8x64xf32>
    %24 = arith.mulf %23, %16 : vector<8x64xf32>
    %25 = vector.extract_strided_slice %15 {offsets = [0, 192], sizes = [8, 64], strides = [1, 1]} : vector<8x320xf32> to vector<8x64xf32>
    %26 = arith.mulf %25, %17 : vector<8x64xf32>
    %27 = arith.addf %24, %26 : vector<8x64xf32>
    %28 = vector.extract_strided_slice %15 {offsets = [0, 256], sizes = [8, 64], strides = [1, 1]} : vector<8x320xf32> to vector<8x64xf32>
    %c0_12 = arith.constant 0 : index
    %c0_13 = arith.constant 0 : index
    %c0_14 = arith.constant 0 : index
    %29 = vector.load %arg12[%c0_12, %c0_13, %c0_14] : memref<1x8x8xf32, #tpu.memory_space<vmem>>, vector<1x8x8xf32>
    %30 = vector.shape_cast %29 : vector<1x8x8xf32> to vector<8x8xf32>
    %31 = vector.extract_strided_slice %22 {offsets = [0, 0], sizes = [8, 16], strides = [1, 1]} : vector<8x64xf32> to vector<8x16xf32>
    %32 = vector.extract_strided_slice %27 {offsets = [0, 0], sizes = [8, 16], strides = [1, 1]} : vector<8x64xf32> to vector<8x16xf32>
    %33 = vector.extract_strided_slice %28 {offsets = [0, 0], sizes = [8, 16], strides = [1, 1]} : vector<8x64xf32> to vector<8x16xf32>
    %cst_15 = arith.constant dense<0.000000e+00> : vector<8x8xf32>
    %34 = tpu.matmul %31, %32, %cst_15 {dimension_numbers = #tpu.dot_dimension_numbers<[1], [1], [0], [0], [0, 0, 1, 0], [], []>} : vector<8x16xf32>, vector<8x16xf32>, vector<8x8xf32> -> vector<8x8xf32>
    %35 = arith.addf %34, %30 : vector<8x8xf32>
    %cst_16 = arith.constant dense<0xFF800000> : vector<8xf32>
    %36 = vector.multi_reduction <maximumf>, %35, %cst_16 [1] : vector<8x8xf32> to vector<8xf32>
    %37 = vector.shape_cast %36 : vector<8xf32> to vector<8x1xf32>
    %38 = vector.broadcast %37 : vector<8x1xf32> to vector<8x8xf32>
    %39 = arith.subf %35, %38 : vector<8x8xf32>
    %40 = math.exp %39 : vector<8x8xf32>
    %cst_17 = arith.constant dense<0.000000e+00> : vector<8xf32>
    %41 = vector.multi_reduction <add>, %40, %cst_17 [1] : vector<8x8xf32> to vector<8xf32>
    %42 = vector.shape_cast %41 : vector<8xf32> to vector<8x1xf32>
    %43 = tpu.reciprocal %42 {approx = true} : vector<8x1xf32> -> vector<8x1xf32>
    %44 = vector.broadcast %43 : vector<8x1xf32> to vector<8x8xf32>
    %45 = arith.mulf %40, %44 : vector<8x8xf32>
    %cst_18 = arith.constant dense<0.000000e+00> : vector<8x16xf32>
    %46 = tpu.matmul %45, %33, %cst_18 {dimension_numbers = #tpu.dot_dimension_numbers<[1], [0], [0], [1], [0, 0, 1, 1], [], []>} : vector<8x8xf32>, vector<8x16xf32>, vector<8x16xf32> -> vector<8x16xf32>
    %c0_19 = arith.constant 0 : index
    %c0_20 = arith.constant 0 : index
    %47 = vector.load %arg5[%c0_19, %c0_20] : memref<64x32xf32, #tpu.memory_space<vmem>>, vector<16x32xf32>
    %cst_21 = arith.constant dense<0.000000e+00> : vector<8x32xf32>
    %48 = tpu.matmul %46, %47, %cst_21 {dimension_numbers = #tpu.dot_dimension_numbers<[1], [0], [0], [1], [0, 0, 1, 1], [], []>} : vector<8x16xf32>, vector<16x32xf32>, vector<8x32xf32> -> vector<8x32xf32>
    %49 = arith.addf %0, %48 : vector<8x32xf32>
    %50 = vector.extract_strided_slice %22 {offsets = [0, 16], sizes = [8, 16], strides = [1, 1]} : vector<8x64xf32> to vector<8x16xf32>
    %51 = vector.extract_strided_slice %27 {offsets = [0, 16], sizes = [8, 16], strides = [1, 1]} : vector<8x64xf32> to vector<8x16xf32>
    %52 = vector.extract_strided_slice %28 {offsets = [0, 16], sizes = [8, 16], strides = [1, 1]} : vector<8x64xf32> to vector<8x16xf32>
    %cst_22 = arith.constant dense<0.000000e+00> : vector<8x8xf32>
    %53 = tpu.matmul %50, %51, %cst_22 {dimension_numbers = #tpu.dot_dimension_numbers<[1], [1], [0], [0], [0, 0, 1, 0], [], []>} : vector<8x16xf32>, vector<8x16xf32>, vector<8x8xf32> -> vector<8x8xf32>
    %54 = arith.addf %53, %30 : vector<8x8xf32>
    %cst_23 = arith.constant dense<0xFF800000> : vector<8xf32>
    %55 = vector.multi_reduction <maximumf>, %54, %cst_23 [1] : vector<8x8xf32> to vector<8xf32>
    %56 = vector.shape_cast %55 : vector<8xf32> to vector<8x1xf32>
    %57 = vector.broadcast %56 : vector<8x1xf32> to vector<8x8xf32>
    %58 = arith.subf %54, %57 : vector<8x8xf32>
    %59 = math.exp %58 : vector<8x8xf32>
    %cst_24 = arith.constant dense<0.000000e+00> : vector<8xf32>
    %60 = vector.multi_reduction <add>, %59, %cst_24 [1] : vector<8x8xf32> to vector<8xf32>
    %61 = vector.shape_cast %60 : vector<8xf32> to vector<8x1xf32>
    %62 = tpu.reciprocal %61 {approx = true} : vector<8x1xf32> -> vector<8x1xf32>
    %63 = vector.broadcast %62 : vector<8x1xf32> to vector<8x8xf32>
    %64 = arith.mulf %59, %63 : vector<8x8xf32>
    %cst_25 = arith.constant dense<0.000000e+00> : vector<8x16xf32>
    %65 = tpu.matmul %64, %52, %cst_25 {dimension_numbers = #tpu.dot_dimension_numbers<[1], [0], [0], [1], [0, 0, 1, 1], [], []>} : vector<8x8xf32>, vector<8x16xf32>, vector<8x16xf32> -> vector<8x16xf32>
    %c16 = arith.constant 16 : index
    %c0_26 = arith.constant 0 : index
    %66 = vector.load %arg5[%c16, %c0_26] : memref<64x32xf32, #tpu.memory_space<vmem>>, vector<16x32xf32>
    %cst_27 = arith.constant dense<0.000000e+00> : vector<8x32xf32>
    %67 = tpu.matmul %65, %66, %cst_27 {dimension_numbers = #tpu.dot_dimension_numbers<[1], [0], [0], [1], [0, 0, 1, 1], [], []>} : vector<8x16xf32>, vector<16x32xf32>, vector<8x32xf32> -> vector<8x32xf32>
    %68 = arith.addf %49, %67 : vector<8x32xf32>
    %69 = vector.extract_strided_slice %22 {offsets = [0, 32], sizes = [8, 16], strides = [1, 1]} : vector<8x64xf32> to vector<8x16xf32>
    %70 = vector.extract_strided_slice %27 {offsets = [0, 32], sizes = [8, 16], strides = [1, 1]} : vector<8x64xf32> to vector<8x16xf32>
    %71 = vector.extract_strided_slice %28 {offsets = [0, 32], sizes = [8, 16], strides = [1, 1]} : vector<8x64xf32> to vector<8x16xf32>
    %cst_28 = arith.constant dense<0.000000e+00> : vector<8x8xf32>
    %72 = tpu.matmul %69, %70, %cst_28 {dimension_numbers = #tpu.dot_dimension_numbers<[1], [1], [0], [0], [0, 0, 1, 0], [], []>} : vector<8x16xf32>, vector<8x16xf32>, vector<8x8xf32> -> vector<8x8xf32>
    %73 = arith.addf %72, %30 : vector<8x8xf32>
    %cst_29 = arith.constant dense<0xFF800000> : vector<8xf32>
    %74 = vector.multi_reduction <maximumf>, %73, %cst_29 [1] : vector<8x8xf32> to vector<8xf32>
    %75 = vector.shape_cast %74 : vector<8xf32> to vector<8x1xf32>
    %76 = vector.broadcast %75 : vector<8x1xf32> to vector<8x8xf32>
    %77 = arith.subf %73, %76 : vector<8x8xf32>
    %78 = math.exp %77 : vector<8x8xf32>
    %cst_30 = arith.constant dense<0.000000e+00> : vector<8xf32>
    %79 = vector.multi_reduction <add>, %78, %cst_30 [1] : vector<8x8xf32> to vector<8xf32>
    %80 = vector.shape_cast %79 : vector<8xf32> to vector<8x1xf32>
    %81 = tpu.reciprocal %80 {approx = true} : vector<8x1xf32> -> vector<8x1xf32>
    %82 = vector.broadcast %81 : vector<8x1xf32> to vector<8x8xf32>
    %83 = arith.mulf %78, %82 : vector<8x8xf32>
    %cst_31 = arith.constant dense<0.000000e+00> : vector<8x16xf32>
    %84 = tpu.matmul %83, %71, %cst_31 {dimension_numbers = #tpu.dot_dimension_numbers<[1], [0], [0], [1], [0, 0, 1, 1], [], []>} : vector<8x8xf32>, vector<8x16xf32>, vector<8x16xf32> -> vector<8x16xf32>
    %c32 = arith.constant 32 : index
    %c0_32 = arith.constant 0 : index
    %85 = vector.load %arg5[%c32, %c0_32] : memref<64x32xf32, #tpu.memory_space<vmem>>, vector<16x32xf32>
    %cst_33 = arith.constant dense<0.000000e+00> : vector<8x32xf32>
    %86 = tpu.matmul %84, %85, %cst_33 {dimension_numbers = #tpu.dot_dimension_numbers<[1], [0], [0], [1], [0, 0, 1, 1], [], []>} : vector<8x16xf32>, vector<16x32xf32>, vector<8x32xf32> -> vector<8x32xf32>
    %87 = arith.addf %68, %86 : vector<8x32xf32>
    %88 = vector.extract_strided_slice %22 {offsets = [0, 48], sizes = [8, 16], strides = [1, 1]} : vector<8x64xf32> to vector<8x16xf32>
    %89 = vector.extract_strided_slice %27 {offsets = [0, 48], sizes = [8, 16], strides = [1, 1]} : vector<8x64xf32> to vector<8x16xf32>
    %90 = vector.extract_strided_slice %28 {offsets = [0, 48], sizes = [8, 16], strides = [1, 1]} : vector<8x64xf32> to vector<8x16xf32>
    %cst_34 = arith.constant dense<0.000000e+00> : vector<8x8xf32>
    %91 = tpu.matmul %88, %89, %cst_34 {dimension_numbers = #tpu.dot_dimension_numbers<[1], [1], [0], [0], [0, 0, 1, 0], [], []>} : vector<8x16xf32>, vector<8x16xf32>, vector<8x8xf32> -> vector<8x8xf32>
    %92 = arith.addf %91, %30 : vector<8x8xf32>
    %cst_35 = arith.constant dense<0xFF800000> : vector<8xf32>
    %93 = vector.multi_reduction <maximumf>, %92, %cst_35 [1] : vector<8x8xf32> to vector<8xf32>
    %94 = vector.shape_cast %93 : vector<8xf32> to vector<8x1xf32>
    %95 = vector.broadcast %94 : vector<8x1xf32> to vector<8x8xf32>
    %96 = arith.subf %92, %95 : vector<8x8xf32>
    %97 = math.exp %96 : vector<8x8xf32>
    %cst_36 = arith.constant dense<0.000000e+00> : vector<8xf32>
    %98 = vector.multi_reduction <add>, %97, %cst_36 [1] : vector<8x8xf32> to vector<8xf32>
    %99 = vector.shape_cast %98 : vector<8xf32> to vector<8x1xf32>
    %100 = tpu.reciprocal %99 {approx = true} : vector<8x1xf32> -> vector<8x1xf32>
    %101 = vector.broadcast %100 : vector<8x1xf32> to vector<8x8xf32>
    %102 = arith.mulf %97, %101 : vector<8x8xf32>
    %cst_37 = arith.constant dense<0.000000e+00> : vector<8x16xf32>
    %103 = tpu.matmul %102, %90, %cst_37 {dimension_numbers = #tpu.dot_dimension_numbers<[1], [0], [0], [1], [0, 0, 1, 1], [], []>} : vector<8x8xf32>, vector<8x16xf32>, vector<8x16xf32> -> vector<8x16xf32>
    %c48 = arith.constant 48 : index
    %c0_38 = arith.constant 0 : index
    %104 = vector.load %arg5[%c48, %c0_38] : memref<64x32xf32, #tpu.memory_space<vmem>>, vector<16x32xf32>
    %cst_39 = arith.constant dense<0.000000e+00> : vector<8x32xf32>
    %105 = tpu.matmul %103, %104, %cst_39 {dimension_numbers = #tpu.dot_dimension_numbers<[1], [0], [0], [1], [0, 0, 1, 1], [], []>} : vector<8x16xf32>, vector<16x32xf32>, vector<8x32xf32> -> vector<8x32xf32>
    %106 = arith.addf %87, %105 : vector<8x32xf32>
    %107 = arith.mulf %106, %106 : vector<8x32xf32>
    %cst_40 = arith.constant dense<0.000000e+00> : vector<8xf32>
    %108 = vector.multi_reduction <add>, %107, %cst_40 [1] : vector<8x32xf32> to vector<8xf32>
    %109 = vector.shape_cast %108 : vector<8xf32> to vector<8x1xf32>
    %cst_41 = arith.constant 3.200000e+01 : f32
    %110 = vector.broadcast %cst_41 : f32 to vector<8x1xf32>
    %111 = arith.divf %109, %110 : vector<8x1xf32>
    %cst_42 = arith.constant 9.99999997E-7 : f32
    %112 = vector.broadcast %cst_42 : f32 to vector<8x1xf32>
    %113 = arith.addf %111, %112 : vector<8x1xf32>
    %114 = math.rsqrt %113 : vector<8x1xf32>
    %115 = vector.broadcast %114 : vector<8x1xf32> to vector<8x32xf32>
    %116 = arith.mulf %106, %115 : vector<8x32xf32>
    %c0_43 = arith.constant 0 : index
    %c0_44 = arith.constant 0 : index
    %117 = vector.load %arg3[%c0_43, %c0_44] : memref<1x32xf32, #tpu.memory_space<vmem>>, vector<1x32xf32>
    %118 = vector.broadcast %117 : vector<1x32xf32> to vector<8x32xf32>
    %119 = arith.mulf %116, %118 : vector<8x32xf32>
    %c0_45 = arith.constant 0 : index
    %c0_46 = arith.constant 0 : index
    %120 = vector.load %arg6[%c0_45, %c0_46] : memref<32x128xf32, #tpu.memory_space<vmem>>, vector<32x128xf32>
    %cst_47 = arith.constant dense<0.000000e+00> : vector<8x128xf32>
    %121 = tpu.matmul %119, %120, %cst_47 {dimension_numbers = #tpu.dot_dimension_numbers<[1], [0], [0], [1], [0, 0, 1, 1], [], []>} : vector<8x32xf32>, vector<32x128xf32>, vector<8x128xf32> -> vector<8x128xf32>
    %c0_48 = arith.constant 0 : index
    %c0_49 = arith.constant 0 : index
    %122 = vector.load %arg7[%c0_48, %c0_49] : memref<1x128xf32, #tpu.memory_space<vmem>>, vector<1x128xf32>
    %123 = vector.broadcast %122 : vector<1x128xf32> to vector<8x128xf32>
    %124 = arith.addf %121, %123 : vector<8x128xf32>
    %125 = vector.extract_strided_slice %124 {offsets = [0, 0], sizes = [8, 64], strides = [1, 1]} : vector<8x128xf32> to vector<8x64xf32>
    %126 = vector.extract_strided_slice %124 {offsets = [0, 64], sizes = [8, 64], strides = [1, 1]} : vector<8x128xf32> to vector<8x64xf32>
    %cst_50 = arith.constant 5.000000e-01 : f32
    %127 = vector.broadcast %cst_50 : f32 to vector<8x64xf32>
    %128 = arith.mulf %127, %125 : vector<8x64xf32>
    %cst_51 = arith.constant 4.471500e-02 : f32
    %129 = vector.broadcast %cst_51 : f32 to vector<8x64xf32>
    %130 = arith.mulf %129, %125 : vector<8x64xf32>
    %131 = arith.mulf %130, %125 : vector<8x64xf32>
    %132 = arith.mulf %131, %125 : vector<8x64xf32>
    %133 = arith.addf %125, %132 : vector<8x64xf32>
    %cst_52 = arith.constant 0.797884583 : f32
    %134 = vector.broadcast %cst_52 : f32 to vector<8x64xf32>
    %135 = arith.mulf %134, %133 : vector<8x64xf32>
    %136 = math.tanh %135 : vector<8x64xf32>
    %cst_53 = arith.constant 1.000000e+00 : f32
    %137 = vector.broadcast %cst_53 : f32 to vector<8x64xf32>
    %138 = arith.addf %137, %136 : vector<8x64xf32>
    %139 = arith.mulf %128, %138 : vector<8x64xf32>
    %140 = arith.mulf %139, %126 : vector<8x64xf32>
    %c0_54 = arith.constant 0 : index
    %c0_55 = arith.constant 0 : index
    %141 = vector.load %arg8[%c0_54, %c0_55] : memref<64x32xf32, #tpu.memory_space<vmem>>, vector<64x32xf32>
    %cst_56 = arith.constant dense<0.000000e+00> : vector<8x32xf32>
    %142 = tpu.matmul %140, %141, %cst_56 {dimension_numbers = #tpu.dot_dimension_numbers<[1], [0], [0], [1], [0, 0, 1, 1], [], []>} : vector<8x64xf32>, vector<64x32xf32>, vector<8x32xf32> -> vector<8x32xf32>
    %c0_57 = arith.constant 0 : index
    %c0_58 = arith.constant 0 : index
    %143 = vector.load %arg9[%c0_57, %c0_58] : memref<1x32xf32, #tpu.memory_space<vmem>>, vector<1x32xf32>
    %144 = vector.broadcast %143 : vector<1x32xf32> to vector<8x32xf32>
    %145 = arith.addf %142, %144 : vector<8x32xf32>
    %146 = arith.addf %145, %106 : vector<8x32xf32>
    %c0_59 = arith.constant 0 : index
    %c0_60 = arith.constant 0 : index
    %147 = vector.load %arg13[%c0_59, %c0_60] : memref<8x32xf32, #tpu.memory_space<vmem>>, vector<8x32xf32>
    tpu.vector_store %arg13[%c0_59, %c0_60], %146 {strides = array<i32>} : memref<8x32xf32, #tpu.memory_space<vmem>>, vector<8x32xf32>,
    return
  }
  func.func @transform_0(%arg0: i32) -> (i32, i32) {
    %c0_i32 = arith.constant 0 : i32
    %c0_i32_0 = arith.constant 0 : i32
    return %arg0, %c0_i32 : i32, i32
  }
  func.func @transform_1(%arg0: i32) -> (i32, i32) {
    %c0_i32 = arith.constant 0 : i32
    %c0_i32_0 = arith.constant 0 : i32
    %c0_i32_1 = arith.constant 0 : i32
    return %c0_i32, %c0_i32_0 : i32, i32
  }
  func.func @transform_2(%arg0: i32) -> (i32, i32) {
    %c0_i32 = arith.constant 0 : i32
    %c0_i32_0 = arith.constant 0 : i32
    %c0_i32_1 = arith.constant 0 : i32
    return %c0_i32, %c0_i32_0 : i32, i32
  }
  func.func @transform_3(%arg0: i32) -> (i32, i32) {
    %c0_i32 = arith.constant 0 : i32
    %c0_i32_0 = arith.constant 0 : i32
    %c0_i32_1 = arith.constant 0 : i32
    return %c0_i32, %c0_i32_0 : i32, i32
  }
  func.func @transform_4(%arg0: i32) -> (i32, i32) {
    %c0_i32 = arith.constant 0 : i32
    %c0_i32_0 = arith.constant 0 : i32
    %c0_i32_1 = arith.constant 0 : i32
    return %c0_i32, %c0_i32_0 : i32, i32
  }
  func.func @transform_5(%arg0: i32) -> (i32, i32) {
    %c0_i32 = arith.constant 0 : i32
    %c0_i32_0 = arith.constant 0 : i32
    %c0_i32_1 = arith.constant 0 : i32
    return %c0_i32, %c0_i32_0 : i32, i32
  }
  func.func @transform_6(%arg0: i32) -> (i32, i32) {
    %c0_i32 = arith.constant 0 : i32
    %c0_i32_0 = arith.constant 0 : i32
    %c0_i32_1 = arith.constant 0 : i32
    return %c0_i32, %c0_i32_0 : i32, i32
  }
  func.func @transform_7(%arg0: i32) -> (i32, i32) {
    %c0_i32 = arith.constant 0 : i32
    %c0_i32_0 = arith.constant 0 : i32
    %c0_i32_1 = arith.constant 0 : i32
    return %c0_i32, %c0_i32_0 : i32, i32
  }
  func.func @transform_8(%arg0: i32) -> (i32, i32) {
    %c0_i32 = arith.constant 0 : i32
    %c0_i32_0 = arith.constant 0 : i32
    %c0_i32_1 = arith.constant 0 : i32
    return %c0_i32, %c0_i32_0 : i32, i32
  }
  func.func @transform_9(%arg0: i32) -> (i32, i32) {
    %c0_i32 = arith.constant 0 : i32
    %c0_i32_0 = arith.constant 0 : i32
    return %arg0, %c0_i32 : i32, i32
  }
  func.func @transform_10(%arg0: i32) -> (i32, i32) {
    %c0_i32 = arith.constant 0 : i32
    %c0_i32_0 = arith.constant 0 : i32
    return %arg0, %c0_i32 : i32, i32
  }
  func.func @transform_11(%arg0: i32) -> (i32, i32, i32) {
    %c0_i32 = arith.constant 0 : i32
    %c0_i32_0 = arith.constant 0 : i32
    %c0_i32_1 = arith.constant 0 : i32
    return %arg0, %c0_i32, %c0_i32_0 : i32, i32, i32
  }
  func.func @transform_12(%arg0: i32) -> (i32, i32) {
    %c0_i32 = arith.constant 0 : i32
    %c0_i32_0 = arith.constant 0 : i32
    return %arg0, %c0_i32 : i32, i32
  }
}

</mosaic_0001>

<llo_original>
// kernel: tile.14
$region0: #{tile.14}
  %s0 = inlined_call_operand.vmem [shape: f32[2,1,8,4,16], index: 0, kind: input, shape index: {}]
  %s1 = inlined_call_operand.vmem [shape: f32[16,64], index: 1, kind: output, shape index: {}]
  $region1: #{tile.14} parent=0
    #allocation0 [shape = 'u8[65536]{0}', space=vmem, size = 0x10000, scoped, tag = 'scoped mem for input reshape']
    %s3 = sshllo.u32 0, 4
    %s4 = smul.addr 4, 15
    %s5 = scalar_lea.vmem %s0, %s4
    %v6 = vld [vmem:[%s5] sm:%s3]
    %s7 = scalar_lea.vmem [#allocation0], 120
    %8 = vst [vmem:[%s7] sm:%s3] %v6
    %s9 = smul.addr 4, 14
    %s10 = scalar_lea.vmem %s0, %s9
    %v11 = vld [vmem:[%s10] sm:%s3]
    %s12 = scalar_lea.vmem [#allocation0], 112
    %13 = vst [vmem:[%s12] sm:%s3] %v11
    %s14 = smul.addr 4, 13
    %s15 = scalar_lea.vmem %s0, %s14
    %v16 = vld [vmem:[%s15] sm:%s3]
    %s17 = scalar_lea.vmem [#allocation0], 104
    %18 = vst [vmem:[%s17] sm:%s3] %v16
    %s19 = smul.addr 4, 12
    %s20 = scalar_lea.vmem %s0, %s19
    %v21 = vld [vmem:[%s20] sm:%s3]
    %s22 = scalar_lea.vmem [#allocation0], 96
    %23 = vst [vmem:[%s22] sm:%s3] %v21
    %s24 = smul.addr 4, 11
    %s25 = scalar_lea.vmem %s0, %s24
    %v26 = vld [vmem:[%s25] sm:%s3]
    %s27 = scalar_lea.vmem [#allocation0], 88
    %28 = vst [vmem:[%s27] sm:%s3] %v26
    %s29 = smul.addr 4, 10
    %s30 = scalar_lea.vmem %s0, %s29
    %v31 = vld [vmem:[%s30] sm:%s3]
    %s32 = scalar_lea.vmem [#allocation0], 80
    %33 = vst [vmem:[%s32] sm:%s3] %v31
    %s34 = smul.addr 4, 9
    %s35 = scalar_lea.vmem %s0, %s34
    %v36 = vld [vmem:[%s35] sm:%s3]
    %s37 = scalar_lea.vmem [#allocation0], 72
    %38 = vst [vmem:[%s37] sm:%s3] %v36
    %s39 = smul.addr 4, 8
    %s40 = scalar_lea.vmem %s0, %s39
    %v41 = vld [vmem:[%s40] sm:%s3]
    %s42 = scalar_lea.vmem [#allocation0], 64
    %43 = vst [vmem:[%s42] sm:%s3] %v41
    %s44 = smul.addr 4, 7
    %s45 = scalar_lea.vmem %s0, %s44
    %v46 = vld [vmem:[%s45] sm:%s3]
    %s47 = scalar_lea.vmem [#allocation0], 56
    %48 = vst [vmem:[%s47] sm:%s3] %v46
    %s49 = smul.addr 4, 6
    %s50 = scalar_lea.vmem %s0, %s49
    %v51 = vld [vmem:[%s50] sm:%s3]
    %s52 = scalar_lea.vmem [#allocation0], 48
    %53 = vst [vmem:[%s52] sm:%s3] %v51
    %s54 = smul.addr 4, 5
    %s55 = scalar_lea.vmem %s0, %s54
    %v56 = vld [vmem:[%s55] sm:%s3]
    %s57 = scalar_lea.vmem [#allocation0], 40
    %58 = vst [vmem:[%s57] sm:%s3] %v56
    %s59 = smul.addr 4, 4
    %s60 = scalar_lea.vmem %s0, %s59
    %v61 = vld [vmem:[%s60] sm:%s3]
    %s62 = scalar_lea.vmem [#allocation0], 32
    %63 = vst [vmem:[%s62] sm:%s3] %v61
    %s64 = smul.addr 4, 3
    %s65 = scalar_lea.vmem %s0, %s64
    %v66 = vld [vmem:[%s65] sm:%s3]
    %s67 = scalar_lea.vmem [#allocation0], 24
    %68 = vst [vmem:[%s67] sm:%s3] %v66
    %s69 = smul.addr 4, 2
    %s70 = scalar_lea.vmem %s0, %s69
    %v71 = vld [vmem:[%s70] sm:%s3]
    %s72 = scalar_lea.vmem [#allocation0], 16
    %73 = vst [vmem:[%s72] sm:%s3] %v71
    %s74 = scalar_lea.vmem %s0, 4
    %v75 = vld [vmem:[%s74] sm:%s3]
    %s76 = scalar_lea.vmem [#allocation0], 8
    %77 = vst [vmem:[%s76] sm:%s3] %v75
    %v78 = vld [vmem:[%s0] sm:%s3]
    %79 = vst [vmem:[#allocation0] sm:%s3] %v78
    %v80 = vld [vmem:[#allocation0] ss:$8 sm:$0xf]
    %v81 = vld [vmem:[#allocation0] ss:$8 sm:$0xf0]
    %vm82 = vcmask 1047556
    %v83 = vsel %vm82, %v81, %v80
    %vm84 = vcmask 130048
    %85 = vst.msk [vmem:[%s1] sm:$0xff] %vm84, %v83
    %s86 = scalar_lea.vmem [#allocation0], 64
    %v87 = vld [vmem:[%s86] ss:$8 sm:$0xf]
    %s88 = scalar_lea.vmem [#allocation0], 64
    %v89 = vld [vmem:[%s88] ss:$8 sm:$0xf0]
    %vm90 = vcmask 1047556
    %v91 = vsel %vm90, %v89, %v87
    %vm92 = vcmask 130048
    %s93 = scalar_lea.vmem %s1, 8
    %94 = vst.msk [vmem:[%s93] sm:$0xff] %vm92, %v91
    %s95 = scalar_lea.vmem [#allocation0], 3
    %v96 = vld [vmem:[%s95] ss:$8 sm:$0xf]
    %s97 = scalar_lea.vmem [#allocation0], 3
    %v98 = vld [vmem:[%s97] ss:$8 sm:$0xf0]
    %vm99 = vcmask 1047556
    %v100 = vsel %vm99, %v98, %v96
    %101 = vrot.lane.b32.xlu0 %v100, 48
    %v102 = vpop.permute.xlu0 %101
    %vm103 = vcmask 523648
    %104 = vst.msk [vmem:[%s1] sm:$0xff] %vm103, %v102
    %s105 = scalar_lea.vmem [#allocation0], 67
    %v106 = vld [vmem:[%s105] ss:$8 sm:$0xf]
    %s107 = scalar_lea.vmem [#allocation0], 67
    %v108 = vld [vmem:[%s107] ss:$8 sm:$0xf0]
    %vm109 = vcmask 1047556
    %v110 = vsel %vm109, %v108, %v106
    %111 = vrot.lane.b32.xlu0 %v110, 48
    %v112 = vpop.permute.xlu0 %111
    %vm113 = vcmask 523648
    %s114 = scalar_lea.vmem %s1, 8
    %115 = vst.msk [vmem:[%s114] sm:$0xff] %vm113, %v112
    %s116 = scalar_lea.vmem [#allocation0], 2
    %v117 = vld [vmem:[%s116] ss:$8 sm:$0xf]
    %s118 = scalar_lea.vmem [#allocation0], 2
    %v119 = vld [vmem:[%s118] ss:$8 sm:$0xf0]
    %vm120 = vcmask 1047556
    %v121 = vsel %vm120, %v119, %v117
    %122 = vrot.lane.b32.xlu0 %v121, 32
    %v123 = vpop.permute.xlu0 %122
    %vm124 = vcmask 392448
    %125 = vst.msk [vmem:[%s1] sm:$0xff] %vm124, %v123
    %s126 = scalar_lea.vmem [#allocation0], 66
    %v127 = vld [vmem:[%s126] ss:$8 sm:$0xf]
    %s128 = scalar_lea.vmem [#allocation0], 66
    %v129 = vld [vmem:[%s128] ss:$8 sm:$0xf0]
    %vm130 = vcmask 1047556
    %v131 = vsel %vm130, %v129, %v127
    %132 = vrot.lane.b32.xlu0 %v131, 32
    %v133 = vpop.permute.xlu0 %132
    %vm134 = vcmask 392448
    %s135 = scalar_lea.vmem %s1, 8
    %136 = vst.msk [vmem:[%s135] sm:$0xff] %vm134, %v133
    %s137 = scalar_lea.vmem [#allocation0], 1
    %v138 = vld [vmem:[%s137] ss:$8 sm:$0xf]
    %s139 = scalar_lea.vmem [#allocation0], 1
    %v140 = vld [vmem:[%s139] ss:$8 sm:$0xf0]
    %vm141 = vcmask 1047556
    %v142 = vsel %vm141, %v140, %v138
    %143 = vrot.lane.b32.xlu0 %v142, 16
    %v144 = vpop.permute.xlu0 %143
    %vm145 = vcmask 261248
    %146 = vst.msk [vmem:[%s1] sm:$0xff] %vm145, %v144
    %s147 = scalar_lea.vmem [#allocation0], 65
    %v148 = vld [vmem:[%s147] ss:$8 sm:$0xf]
    %s149 = scalar_lea.vmem [#allocation0], 65
    %v150 = vld [vmem:[%s149] ss:$8 sm:$0xf0]
    %vm151 = vcmask 1047556
    %v152 = vsel %vm151, %v150, %v148
    %153 = vrot.lane.b32.xlu0 %v152, 16
    %v154 = vpop.permute.xlu0 %153
    %vm155 = vcmask 261248
    %s156 = scalar_lea.vmem %s1, 8
    %157 = vst.msk [vmem:[%s156] sm:$0xff] %vm155, %v154

// kernel: gemma_decoder_layer.1
$region0: #{gemma_decoder_layer.1}
  #allocation0 [shape = 'u32[]', space=smem, size = 0x4, offset = 0x4, fixed_abs, tag = 'smem constant byte address 0x4 - core index']
  #allocation1 [shape = 'u32[144,128]{1,0:T(1,128)}', space=vmem, size = 0x12000, scoped, tag = 'internal scratch']
  %s0 = inlined_call_operand.vmem [shape: f32[16,32], index: 0, kind: input, shape index: {}]
  %s1 = inlined_call_operand.vmem [shape: f32[1,32], index: 1, kind: input, shape index: {}]
  %s2 = inlined_call_operand.vmem [shape: f32[1,32], index: 2, kind: input, shape index: {}]
  %s3 = inlined_call_operand.vmem [shape: f32[32,320], index: 3, kind: input, shape index: {}]
  %s4 = inlined_call_operand.vmem [shape: f32[64,32], index: 4, kind: input, shape index: {}]
  %s5 = inlined_call_operand.vmem [shape: f32[32,128], index: 5, kind: input, shape index: {}]
  %s6 = inlined_call_operand.vmem [shape: f32[1,128], index: 6, kind: input, shape index: {}]
  %s7 = inlined_call_operand.vmem [shape: f32[64,32], index: 7, kind: input, shape index: {}]
  %s8 = inlined_call_operand.vmem [shape: f32[1,32], index: 8, kind: input, shape index: {}]
  %s9 = inlined_call_operand.vmem [shape: f32[16,64], index: 9, kind: input, shape index: {}]
  %s10 = inlined_call_operand.vmem [shape: f32[16,64], index: 10, kind: input, shape index: {}]
  %s11 = inlined_call_operand.vmem [shape: f32[2,8,8], index: 11, kind: input, shape index: {}]
  %s12 = inlined_call_operand.hbm [shape: f32[16,32], index: 12, kind: output, shape index: {}]
  %s13 = sld [smem:[#allocation0]]
  $region81: #{gemma_decoder_layer.1} parent=0
    _
  %s15 = ssub.s32 1, %s13
  %s16 = scalar_select 0, %s15, %s13
  $region1: #{gemma_decoder_layer.1} parent=0
    #allocation2 [shape = 'u8[8192]{0}', space=vmem, size = 0x2000, scoped, tag = 'output window, operand 0']
    #allocation3 [shape = 's32[2]{0}', space=sflag, size = 0x8, scoped, tag = 'scoped memory for gemma_decoder_layer.1']
    %17 = vsyncpa [#allocation3], 0
    %s18 = scalar_lea.sflag [#allocation3], 1
    %19 = vsyncpa %s18, 0
    loop: start=0, step=1, limit=4
    $region2: #{gemma_decoder_layer.1} parent=1 // loop_pre_header
      _
    $region3: #{gemma_decoder_layer.1} parent=1 // loop_header
      %s21 = sphi 0, %s25
      %p22 = scmp.ge.s32.totalorder %s21, 4
      %s31 = sphi 0, %s33
      %s34 = sphi 0, %s31
      %s35 = sphi 0, %s34
      %s51 = sphi 0, %s35
      %s55 = sphi 0, %s55
      %s57 = sphi 0, %s55
      %s58 = sphi 0, %s57
      %s72 = sphi 0, %s58
      %s76 = sphi 0, %s76
      %s78 = sphi 0, %s76
      %s79 = sphi 0, %s78
      %s93 = sphi 0, %s79
      %s97 = sphi 0, %s97
      %s99 = sphi 0, %s97
      %s100 = sphi 0, %s99
      %s114 = sphi 0, %s100
      %s118 = sphi 0, %s118
      %s120 = sphi 0, %s118
      %s121 = sphi 0, %s120
      %s135 = sphi 0, %s121
      %s139 = sphi 0, %s139
      %s141 = sphi 0, %s139
      %s142 = sphi 0, %s141
      %s156 = sphi 0, %s142
      %s160 = sphi 0, %s160
      %s162 = sphi 0, %s160
      %s163 = sphi 0, %s162
      %s177 = sphi 0, %s163
      %s181 = sphi 0, %s181
      %s183 = sphi 0, %s181
      %s184 = sphi 0, %s183
      %s198 = sphi 0, %s184
      %s202 = sphi 0, %s202
      %s204 = sphi 0, %s202
      %s205 = sphi 0, %s204
      %s219 = sphi 0, %s205
      %s225 = sphi 0, %s227
      %s228 = sphi 0, %s225
      %s229 = sphi 0, %s228
      %s245 = sphi 0, %s229
      %s251 = sphi 0, %s253
      %s254 = sphi 0, %s251
      %s255 = sphi 0, %s254
      %s271 = sphi 0, %s255
      %s277 = sphi 0, %s279
      %s280 = sphi 0, %s277
      %s281 = sphi 0, %s280
      %s297 = sphi 0, %s281
      %s303 = sphi 0, %s305
      %s306 = sphi 0, %s303
      %s307 = sphi 0, %s306
      %s323 = sphi 0, %s307
    $region4: #{gemma_decoder_layer.1} parent=1 // loop_header_branch
      %24 = sbr.rel (%p22) target = $region8
    $region5: #{gemma_decoder_layer.1} parent=1 // loop_body
      %s26 = ssub.s32 %s21, 1
      %s27 = ssub.s32 %s21, 2
      %s28 = sadd.s32 %s21, 1
      %s29 = ssub.s32 %s21, %s28
      %p30 = scmp.eq.s32.totalorder %s29, 0
      %s32 = sadd.s32 %s31, 1
      %s33 = scalar_select %p30, %s31, %s32
      %p36 = pneg %p30
      %p37 = scmp.eq.s32.totalorder %s21, 1
      %p38 = por %p36, %p37
      %p39 = scmp.ne.s32.totalorder %s31, %s34
      %p40 = scmp.eq.s32.totalorder %s21, 0
      %p41 = por %p39, %p40
      %p42 = scmp.ne.s32.totalorder %s31, %s34
      %p43 = scmp.eq.s32.totalorder %s26, 1
      %p44 = por %p42, %p43
      %p45 = scmp.ne.s32.totalorder %s34, %s35
      %p46 = scmp.eq.s32.totalorder %s26, 0
      %p47 = por %p45, %p46
      %p48 = scmp.ne.s32.totalorder %s34, %s35
      %p49 = scmp.eq.s32.totalorder %s27, 1
      %p50 = por %p48, %p49
      %p52 = scmp.ne.s32.totalorder %s35, %s51
      %p53 = scmp.eq.s32.totalorder %s27, 0
      %p54 = por %p52, %p53
      %s56 = sadd.s32 %s55, 1
      %p59 = scmp.eq.s32.totalorder %s21, 1
      %p60 = scmp.ne.s32.totalorder %s55, %s57
      %p61 = scmp.eq.s32.totalorder %s21, 0
      %p62 = por %p60, %p61
      %p63 = scmp.ne.s32.totalorder %s55, %s57
      %p64 = scmp.eq.s32.totalorder %s26, 1
      %p65 = por %p63, %p64
      %p66 = scmp.ne.s32.totalorder %s57, %s58
      %p67 = scmp.eq.s32.totalorder %s26, 0
      %p68 = por %p66, %p67
      %p69 = scmp.ne.s32.totalorder %s57, %s58
      %p70 = scmp.eq.s32.totalorder %s27, 1
      %p71 = por %p69, %p70
      %p73 = scmp.ne.s32.totalorder %s58, %s72
      %p74 = scmp.eq.s32.totalorder %s27, 0
      %p75 = por %p73, %p74
      %s77 = sadd.s32 %s76, 1
      %p80 = scmp.eq.s32.totalorder %s21, 1
      %p81 = scmp.ne.s32.totalorder %s76, %s78
      %p82 = scmp.eq.s32.totalorder %s21, 0
      %p83 = por %p81, %p82
      %p84 = scmp.ne.s32.totalorder %s76, %s78
      %p85 = scmp.eq.s32.totalorder %s26, 1
      %p86 = por %p84, %p85
      %p87 = scmp.ne.s32.totalorder %s78, %s79
      %p88 = scmp.eq.s32.totalorder %s26, 0
      %p89 = por %p87, %p88
      %p90 = scmp.ne.s32.totalorder %s78, %s79
      %p91 = scmp.eq.s32.totalorder %s27, 1
      %p92 = por %p90, %p91
      %p94 = scmp.ne.s32.totalorder %s79, %s93
      %p95 = scmp.eq.s32.totalorder %s27, 0
      %p96 = por %p94, %p95
      %s98 = sadd.s32 %s97, 1
      %p101 = scmp.eq.s32.totalorder %s21, 1
      %p102 = scmp.ne.s32.totalorder %s97, %s99
      %p103 = scmp.eq.s32.totalorder %s21, 0
      %p104 = por %p102, %p103
      %p105 = scmp.ne.s32.totalorder %s97, %s99
      %p106 = scmp.eq.s32.totalorder %s26, 1
      %p107 = por %p105, %p106
      %p108 = scmp.ne.s32.totalorder %s99, %s100
      %p109 = scmp.eq.s32.totalorder %s26, 0
      %p110 = por %p108, %p109
      %p111 = scmp.ne.s32.totalorder %s99, %s100
      %p112 = scmp.eq.s32.totalorder %s27, 1
      %p113 = por %p111, %p112
      %p115 = scmp.ne.s32.totalorder %s100, %s114
      %p116 = scmp.eq.s32.totalorder %s27, 0
      %p117 = por %p115, %p116
      %s119 = sadd.s32 %s118, 1
      %p122 = scmp.eq.s32.totalorder %s21, 1
      %p123 = scmp.ne.s32.totalorder %s118, %s120
      %p124 = scmp.eq.s32.totalorder %s21, 0
      %p125 = por %p123, %p124
      %p126 = scmp.ne.s32.totalorder %s118, %s120
      %p127 = scmp.eq.s32.totalorder %s26, 1
      %p128 = por %p126, %p127
      %p129 = scmp.ne.s32.totalorder %s120, %s121
      %p130 = scmp.eq.s32.totalorder %s26, 0
      %p131 = por %p129, %p130
      %p132 = scmp.ne.s32.totalorder %s120, %s121
      %p133 = scmp.eq.s32.totalorder %s27, 1
      %p134 = por %p132, %p133
      %p136 = scmp.ne.s32.totalorder %s121, %s135
      %p137 = scmp.eq.s32.totalorder %s27, 0
      %p138 = por %p136, %p137
      %s140 = sadd.s32 %s139, 1
      %p143 = scmp.eq.s32.totalorder %s21, 1
      %p144 = scmp.ne.s32.totalorder %s139, %s141
      %p145 = scmp.eq.s32.totalorder %s21, 0
      %p146 = por %p144, %p145
      %p147 = scmp.ne.s32.totalorder %s139, %s141
      %p148 = scmp.eq.s32.totalorder %s26, 1
      %p149 = por %p147, %p148
      %p150 = scmp.ne.s32.totalorder %s141, %s142
      %p151 = scmp.eq.s32.totalorder %s26, 0
      %p152 = por %p150, %p151
      %p153 = scmp.ne.s32.totalorder %s141, %s142
      %p154 = scmp.eq.s32.totalorder %s27, 1
      %p155 = por %p153, %p154
      %p157 = scmp.ne.s32.totalorder %s142, %s156
      %p158 = scmp.eq.s32.totalorder %s27, 0
      %p159 = por %p157, %p158
      %s161 = sadd.s32 %s160, 1
      %p164 = scmp.eq.s32.totalorder %s21, 1
      %p165 = scmp.ne.s32.totalorder %s160, %s162
      %p166 = scmp.eq.s32.totalorder %s21, 0
      %p167 = por %p165, %p166
      %p168 = scmp.ne.s32.totalorder %s160, %s162
      %p169 = scmp.eq.s32.totalorder %s26, 1
      %p170 = por %p168, %p169
      %p171 = scmp.ne.s32.totalorder %s162, %s163
      %p172 = scmp.eq.s32.totalorder %s26, 0
      %p173 = por %p171, %p172
      %p174 = scmp.ne.s32.totalorder %s162, %s163
      %p175 = scmp.eq.s32.totalorder %s27, 1
      %p176 = por %p174, %p175
      %p178 = scmp.ne.s32.totalorder %s163, %s177
      %p179 = scmp.eq.s32.totalorder %s27, 0
      %p180 = por %p178, %p179
      %s182 = sadd.s32 %s181, 1
      %p185 = scmp.eq.s32.totalorder %s21, 1
      %p186 = scmp.ne.s32.totalorder %s181, %s183
      %p187 = scmp.eq.s32.totalorder %s21, 0
      %p188 = por %p186, %p187
      %p189 = scmp.ne.s32.totalorder %s181, %s183
      %p190 = scmp.eq.s32.totalorder %s26, 1
      %p191 = por %p189, %p190
      %p192 = scmp.ne.s32.totalorder %s183, %s184
      %p193 = scmp.eq.s32.totalorder %s26, 0
      %p194 = por %p192, %p193
      %p195 = scmp.ne.s32.totalorder %s183, %s184
      %p196 = scmp.eq.s32.totalorder %s27, 1
      %p197 = por %p195, %p196
      %p199 = scmp.ne.s32.totalorder %s184, %s198
      %p200 = scmp.eq.s32.totalorder %s27, 0
      %p201 = por %p199, %p200
      %s203 = sadd.s32 %s202, 1
      %p206 = scmp.eq.s32.totalorder %s21, 1
      %p207 = scmp.ne.s32.totalorder %s202, %s204
      %p208 = scmp.eq.s32.totalorder %s21, 0
      %p209 = por %p207, %p208
      %p210 = scmp.ne.s32.totalorder %s202, %s204
      %p211 = scmp.eq.s32.totalorder %s26, 1
      %p212 = por %p210, %p211
      %p213 = scmp.ne.s32.totalorder %s204, %s205
      %p214 = scmp.eq.s32.totalorder %s26, 0
      %p215 = por %p213, %p214
      %p216 = scmp.ne.s32.totalorder %s204, %s205
      %p217 = scmp.eq.s32.totalorder %s27, 1
      %p218 = por %p216, %p217
      %p220 = scmp.ne.s32.totalorder %s205, %s219
      %p221 = scmp.eq.s32.totalorder %s27, 0
      %p222 = por %p220, %p221
      %s223 = ssub.s32 %s21, %s28
      %p224 = scmp.eq.s32.totalorder %s223, 0
      %s226 = sadd.s32 %s225, 1
      %s227 = scalar_select %p224, %s225, %s226
      %p230 = pneg %p224
      %p231 = scmp.eq.s32.totalorder %s21, 1
      %p232 = por %p230, %p231
      %p233 = scmp.ne.s32.totalorder %s225, %s228
      %p234 = scmp.eq.s32.totalorder %s21, 0
      %p235 = por %p233, %p234
      %p236 = scmp.ne.s32.totalorder %s225, %s228
      %p237 = scmp.eq.s32.totalorder %s26, 1
      %p238 = por %p236, %p237
      %p239 = scmp.ne.s32.totalorder %s228, %s229
      %p240 = scmp.eq.s32.totalorder %s26, 0
      %p241 = por %p239, %p240
      %p242 = scmp.ne.s32.totalorder %s228, %s229
      %p243 = scmp.eq.s32.totalorder %s27, 1
      %p244 = por %p242, %p243
      %p246 = scmp.ne.s32.totalorder %s229, %s245
      %p247 = scmp.eq.s32.totalorder %s27, 0
      %p248 = por %p246, %p247
      %s249 = ssub.s32 %s21, %s28
      %p250 = scmp.eq.s32.totalorder %s249, 0
      %s252 = sadd.s32 %s251, 1
      %s253 = scalar_select %p250, %s251, %s252
      %p256 = pneg %p250
      %p257 = scmp.eq.s32.totalorder %s21, 1
      %p258 = por %p256, %p257
      %p259 = scmp.ne.s32.totalorder %s251, %s254
      %p260 = scmp.eq.s32.totalorder %s21, 0
      %p261 = por %p259, %p260
      %p262 = scmp.ne.s32.totalorder %s251, %s254
      %p263 = scmp.eq.s32.totalorder %s26, 1
      %p264 = por %p262, %p263
      %p265 = scmp.ne.s32.totalorder %s254, %s255
      %p266 = scmp.eq.s32.totalorder %s26, 0
      %p267 = por %p265, %p266
      %p268 = scmp.ne.s32.totalorder %s254, %s255
      %p269 = scmp.eq.s32.totalorder %s27, 1
      %p270 = por %p268, %p269
      %p272 = scmp.ne.s32.totalorder %s255, %s271
      %p273 = scmp.eq.s32.totalorder %s27, 0
      %p274 = por %p272, %p273
      %s275 = ssub.s32 %s21, %s28
      %p276 = scmp.eq.s32.totalorder %s275, 0
      %s278 = sadd.s32 %s277, 1
      %s279 = scalar_select %p276, %s277, %s278
      %p282 = pneg %p276
      %p283 = scmp.eq.s32.totalorder %s21, 1
      %p284 = por %p282, %p283
      %p285 = scmp.ne.s32.totalorder %s277, %s280
      %p286 = scmp.eq.s32.totalorder %s21, 0
      %p287 = por %p285, %p286
      %p288 = scmp.ne.s32.totalorder %s277, %s280
      %p289 = scmp.eq.s32.totalorder %s26, 1
      %p290 = por %p288, %p289
      %p291 = scmp.ne.s32.totalorder %s280, %s281
      %p292 = scmp.eq.s32.totalorder %s26, 0
      %p293 = por %p291, %p292
      %p294 = scmp.ne.s32.totalorder %s280, %s281
      %p295 = scmp.eq.s32.totalorder %s27, 1
      %p296 = por %p294, %p295
      %p298 = scmp.ne.s32.totalorder %s281, %s297
      %p299 = scmp.eq.s32.totalorder %s27, 0
      %p300 = por %p298, %p299
      %s301 = ssub.s32 %s21, %s28
      %p302 = scmp.eq.s32.totalorder %s301, 0
      %s304 = sadd.s32 %s303, 1
      %s305 = scalar_select %p302, %s303, %s304
      %p308 = pneg %p302
      %p309 = scmp.eq.s32.totalorder %s21, 1
      %p310 = por %p308, %p309
      %p311 = scmp.ne.s32.totalorder %s303, %s306
      %p312 = scmp.eq.s32.totalorder %s21, 0
      %p313 = por %p311, %p312
      %p314 = scmp.ne.s32.totalorder %s303, %s306
      %p315 = scmp.eq.s32.totalorder %s26, 1
      %p316 = por %p314, %p315
      %p317 = scmp.ne.s32.totalorder %s306, %s307
      %p318 = scmp.eq.s32.totalorder %s26, 0
      %p319 = por %p317, %p318
      %p320 = scmp.ne.s32.totalorder %s306, %s307
      %p321 = scmp.eq.s32.totalorder %s27, 1
      %p322 = por %p320, %p321
      %p324 = scmp.ne.s32.totalorder %s307, %s323
      %p325 = scmp.eq.s32.totalorder %s27, 0
      %p326 = por %p324, %p325
      %p327 = scmp.le.s32.totalorder 1, %s21
      %p328 = scmp.lt.s32.totalorder %s21, 3
      %p329 = pnand %p327, %p328
      %p330 = pneg %p329
      // Predicated region
      $region9: #{gemma_decoder_layer.1} parent=5 // pred_check
        _
      $region10: #{gemma_decoder_layer.1} parent=5 // pred_check_branch
        %332 = sbr.rel (%p329) target = $region12
      $region11: #{gemma_decoder_layer.1} parent=5 // pred_region
        %s333 = ssub.s32 %s21, 1
        // Predicated region
        $region13: #{gemma_decoder_layer.1} parent=11 // pred_check
          %p334 = pneg %p68
        $region14: #{gemma_decoder_layer.1} parent=11 // pred_check_branch
          %336 = sbr.rel (%p334) target = $region16
        $region15: #{gemma_decoder_layer.1} parent=11 // pred_region
          _
        $region16: #{gemma_decoder_layer.1} parent=11 // pred_fallthru
          _
        // Predicated region
        $region17: #{gemma_decoder_layer.1} parent=11 // pred_check
          %p337 = pneg %p89
        $region18: #{gemma_decoder_layer.1} parent=11 // pred_check_branch
          %339 = sbr.rel (%p337) target = $region20
        $region19: #{gemma_decoder_layer.1} parent=11 // pred_region
          _
        $region20: #{gemma_decoder_layer.1} parent=11 // pred_fallthru
          _
        // Predicated region
        $region21: #{gemma_decoder_layer.1} parent=11 // pred_check
          %p340 = pneg %p110
        $region22: #{gemma_decoder_layer.1} parent=11 // pred_check_branch
          %342 = sbr.rel (%p340) target = $region24
        $region23: #{gemma_decoder_layer.1} parent=11 // pred_region
          _
        $region24: #{gemma_decoder_layer.1} parent=11 // pred_fallthru
          _
        // Predicated region
        $region25: #{gemma_decoder_layer.1} parent=11 // pred_check
          %p343 = pneg %p131
        $region26: #{gemma_decoder_layer.1} parent=11 // pred_check_branch
          %345 = sbr.rel (%p343) target = $region28
        $region27: #{gemma_decoder_layer.1} parent=11 // pred_region
          _
        $region28: #{gemma_decoder_layer.1} parent=11 // pred_fallthru
          _
        // Predicated region
        $region29: #{gemma_decoder_layer.1} parent=11 // pred_check
          %p346 = pneg %p152
        $region30: #{gemma_decoder_layer.1} parent=11 // pred_check_branch
          %348 = sbr.rel (%p346) target = $region32
        $region31: #{gemma_decoder_layer.1} parent=11 // pred_region
          _
        $region32: #{gemma_decoder_layer.1} parent=11 // pred_fallthru
          _
        // Predicated region
        $region33: #{gemma_decoder_layer.1} parent=11 // pred_check
          %p349 = pneg %p173
        $region34: #{gemma_decoder_layer.1} parent=11 // pred_check_branch
          %351 = sbr.rel (%p349) target = $region36
        $region35: #{gemma_decoder_layer.1} parent=11 // pred_region
          _
        $region36: #{gemma_decoder_layer.1} parent=11 // pred_fallthru
          _
        // Predicated region
        $region37: #{gemma_decoder_layer.1} parent=11 // pred_check
          %p352 = pneg %p194
        $region38: #{gemma_decoder_layer.1} parent=11 // pred_check_branch
          %354 = sbr.rel (%p352) target = $region40
        $region39: #{gemma_decoder_layer.1} parent=11 // pred_region
          _
        $region40: #{gemma_decoder_layer.1} parent=11 // pred_fallthru
          _
        // Predicated region
        $region41: #{gemma_decoder_layer.1} parent=11 // pred_check
          %p355 = pneg %p215
        $region42: #{gemma_decoder_layer.1} parent=11 // pred_check_branch
          %357 = sbr.rel (%p355) target = $region44
        $region43: #{gemma_decoder_layer.1} parent=11 // pred_region
          _
        $region44: #{gemma_decoder_layer.1} parent=11 // pred_fallthru
          _
      $region12: #{gemma_decoder_layer.1} parent=5 // pred_fallthru
        _
      %p358 = scmp.lt.s32.totalorder %s21, 2
      // Predicated region
      $region45: #{gemma_decoder_layer.1} parent=5 // pred_check
        %p359 = pneg %p358
      $region46: #{gemma_decoder_layer.1} parent=5 // pred_check_branch
        %361 = sbr.rel (%p359) target = $region48
      $region47: #{gemma_decoder_layer.1} parent=5 // pred_region
        // Predicated region
        $region49: #{gemma_decoder_layer.1} parent=47 // pred_check
          %p362 = pneg %p41
        $region50: #{gemma_decoder_layer.1} parent=47 // pred_check_branch
          %364 = sbr.rel (%p362) target = $region52
        $region51: #{gemma_decoder_layer.1} parent=47 // pred_region
          %p365 = scmp.lt.s32.totalorder %s21, 1
          %s366 = scalar_select %p365, %s21, 1
          %s367 = smul.addr %s366, 8
          %s368 = scalar_lea.vmem %s0, %s367
        $region52: #{gemma_decoder_layer.1} parent=47 // pred_fallthru
          _
        // Predicated region
        $region53: #{gemma_decoder_layer.1} parent=47 // pred_check
          %p369 = pneg %p235
        $region54: #{gemma_decoder_layer.1} parent=47 // pred_check_branch
          %371 = sbr.rel (%p369) target = $region56
        $region55: #{gemma_decoder_layer.1} parent=47 // pred_region
          %p372 = scmp.lt.s32.totalorder %s21, 1
          %s373 = scalar_select %p372, %s21, 1
          %s374 = smul.addr %s373, 8
          %s375 = scalar_lea.vmem %s9, %s374
        $region56: #{gemma_decoder_layer.1} parent=47 // pred_fallthru
          _
        // Predicated region
        $region57: #{gemma_decoder_layer.1} parent=47 // pred_check
          %p376 = pneg %p261
        $region58: #{gemma_decoder_layer.1} parent=47 // pred_check_branch
          %378 = sbr.rel (%p376) target = $region60
        $region59: #{gemma_decoder_layer.1} parent=47 // pred_region
          %p379 = scmp.lt.s32.totalorder %s21, 1
          %s380 = scalar_select %p379, %s21, 1
          %s381 = smul.addr %s380, 8
          %s382 = scalar_lea.vmem %s10, %s381
        $region60: #{gemma_decoder_layer.1} parent=47 // pred_fallthru
          _
        // Predicated region
        $region61: #{gemma_decoder_layer.1} parent=47 // pred_check
          %p383 = pneg %p287
        $region62: #{gemma_decoder_layer.1} parent=47 // pred_check_branch
          %385 = sbr.rel (%p383) target = $region64
        $region63: #{gemma_decoder_layer.1} parent=47 // pred_region
          %p386 = scmp.lt.s32.totalorder %s21, 1
          %s387 = scalar_select %p386, %s21, 1
          %s388 = smul.addr %s387, 8
          %s389 = scalar_lea.vmem %s11, %s388
        $region64: #{gemma_decoder_layer.1} parent=47 // pred_fallthru
          _
      $region48: #{gemma_decoder_layer.1} parent=5 // pred_fallthru
        _
      %p390 = scmp.le.s32.totalorder 1, %s21
      %p391 = scmp.lt.s32.totalorder %s21, 3
      %p392 = pnand %p390, %p391
      %p393 = pneg %p392
      // Predicated region
      $region65: #{gemma_decoder_layer.1} parent=5 // pred_check
        _
      $region66: #{gemma_decoder_layer.1} parent=5 // pred_check_branch
        %395 = sbr.rel (%p392) target = $region68
      $region67: #{gemma_decoder_layer.1} parent=5 // pred_region
        %s396 = ssub.s32 %s21, 1
        %p397 = scmp.lt.s32.totalorder %s26, 1
        %s398 = scalar_select %p397, %s26, 1
        %s399 = smul.addr %s398, 8
        %s400 = scalar_lea.vmem %s0, %s399
        %p401 = pneg %p47
        %p402 = pneg %p44
        %p403 = pneg %p68
        %p404 = pneg %p65
        %p405 = pneg %p89
        %p406 = pneg %p86
        %p407 = pneg %p110
        %p408 = pneg %p107
        %p409 = pneg %p131
        %p410 = pneg %p128
        %p411 = pneg %p152
        %p412 = pneg %p149
        %p413 = pneg %p173
        %p414 = pneg %p170
        %p415 = pneg %p194
        %p416 = pneg %p191
        %p417 = pneg %p215
        %p418 = pneg %p212
        %p419 = scmp.lt.s32.totalorder %s26, 1
        %s420 = scalar_select %p419, %s26, 1
        %s421 = smul.addr %s420, 8
        %s422 = scalar_lea.vmem %s9, %s421
        %p423 = pneg %p241
        %p424 = pneg %p238
        %p425 = scmp.lt.s32.totalorder %s26, 1
        %s426 = scalar_select %p425, %s26, 1
        %s427 = smul.addr %s426, 8
        %s428 = scalar_lea.vmem %s10, %s427
        %p429 = pneg %p267
        %p430 = pneg %p264
        %p431 = scmp.lt.s32.totalorder %s26, 1
        %s432 = scalar_select %p431, %s26, 1
        %s433 = smul.addr %s432, 8
        %s434 = scalar_lea.vmem %s11, %s433
        %p435 = pneg %p293
        %p436 = pneg %p290
        %p437 = pneg %p319
        %p438 = pneg %p316
        %s439 = sand.u32 %s306, 1
        %s440 = scalar_lea.sflag [#allocation3], %s439
        %s441 = sand.u32 %s306, 1
        %s442 = smul.addr %s441, 8
        %s443 = scalar_lea.vmem [#allocation2], %s442
        %p444 = scmp.lt.s32.totalorder %s26, 1
        %s445 = scalar_select %p444, %s26, 1
        %s446 = smul.addr %s445, 8
        %s447 = scalar_lea.vmem %s0, %s446
        %p448 = scmp.lt.s32.totalorder %s26, 1
        %s449 = scalar_select %p448, %s26, 1
        %s450 = smul.addr %s449, 8
        %s451 = scalar_lea.vmem %s9, %s450
        %p452 = scmp.lt.s32.totalorder %s26, 1
        %s453 = scalar_select %p452, %s26, 1
        %s454 = smul.addr %s453, 8
        %s455 = scalar_lea.vmem %s10, %s454
        %p456 = scmp.lt.s32.totalorder %s26, 1
        %s457 = scalar_select %p456, %s26, 1
        %s458 = smul.addr %s457, 8
        %s459 = scalar_lea.vmem %s11, %s458
        %v460 = vld [vmem:[%s447] sm:$0xff]
        %v461 = vmul.f32 %v460, %v460
        %vm462 = vcmask 261120
        %v463 = vsel %vm462, %v461, 0.0
        %464 = vadd.xlane.f32.xlu0 %v463
        %v465 = vpop.xlane.xlu0 %464
        %v466 = vrcp.pop 32.0
        %v467 = vmul.f32 %v465, %v466
        %v468 = vadd.f32 %v467, 1e-06
        %v469 = vrsqrt.pop %v468
        %v470 = vmul.f32 %v460, %v469
        %v471 = vld [vmem:[%s1] sm:$0x1]
        %v473 = vlaneseq
        %v474 = vshrl.u32 %v473, 7
        %v475 = vsub.s32 0, %v474
        %v476 = vrot.slane %v471, %v475
        %v478 = vmul.f32 %v470, %v476
        %v479 = vld [vmem:[%s3] sm:$0xff]
        %v480 = vld [vmem:[%s3 + $0x8] sm:$0xff]
        %v481 = vld [vmem:[%s3 + $0x10] sm:$0xff]
        %v482 = vld [vmem:[%s3 + $0x18] sm:$0xff]
        %v483 = vld [vmem:[%s3 + $0x20] sm:$0xff]
        %v484 = vld [vmem:[%s3 + $0x28] sm:$0xff]
        %v485 = vld [vmem:[%s3 + $0x30] sm:$0xff]
        %v486 = vld [vmem:[%s3 + $0x38] sm:$0xff]
        %v487 = vld [vmem:[%s3 + $0x40] sm:$0xff]
        %v488 = vld [vmem:[%s3 + $0x48] sm:$0xff]
        %v489 = vld [vmem:[%s3 + $0x50] sm:$0xff]
        %v490 = vld [vmem:[%s3 + $0x58] sm:$0xff]
        %v492 = vsel %vm462, %v478, 0
        %494 = vmatprep.subr.mxu0 %v480
        %495 = vmatpush1.msra.mxu0 %v479
        %496 = vmatprep.subr.mxu0 %v483
        %497 = vmatpush1.msra.mxu0 %v482
        %498 = vmatprep.subr.mxu0 %v486
        %499 = vmatpush1.msra.mxu0 %v485
        %500 = vmatprep.subr.mxu0 %v489
        %501 = vmatpush1.msra.mxu0 %v488
        %502 = vmatprep.subr.mxu0 0.0
        %503 = vmatpush1.msra.mxu0 0.0
        %504 = vmatprep.subr.mxu0 0.0
        %505 = vmatpush1.msra.mxu0 0.0
        %506 = vmatprep.subr.mxu0 0.0
        %507 = vmatpush1.msra.mxu0 0.0
        %508 = vmatprep.subr.mxu0 0.0
        %509 = vmatpush1.msra.mxu0 0.0
        %510 = vmatprep.subr.mxu0 0.0
        %511 = vmatpush1.msra.mxu0 0.0
        %512 = vmatprep.subr.mxu0 0.0
        %513 = vmatpush1.msra.mxu0 0.0
        %514 = vmatprep.subr.mxu0 0.0
        %515 = vmatpush1.msra.mxu0 0.0
        %516 = vmatprep.subr.mxu0 0.0
        %517 = vmatpush1.msra.mxu0 0.0
        %518 = vmatprep.subr.mxu0 0.0
        %519 = vmatpush1.msra.mxu0 0.0
        %520 = vmatprep.subr.mxu0 0.0
        %521 = vmatpush1.msra.mxu0 0.0
        %522 = vmatprep.subr.mxu0 0.0
        %523 = vmatpush1.msra.mxu0 0.0
        %524 = vmatprep.subr.mxu0 0.0
        %525 = vmatpush1.msra.mxu0 0.0
        %526 = vmatprep.subr.mxu0 0.0
        %527 = vmatpush1.msra.mxu0 0.0
        %528 = vmatprep.subr.mxu0 0.0
        %529 = vmatpush1.msra.mxu0 0.0
        %530 = vmatprep.subr.mxu0 0.0
        %531 = vmatpush1.msra.mxu0 0.0
        %532 = vmatprep.subr.mxu0 0.0
        %533 = vmatpush1.msra.mxu0 0.0
        %534 = vmatprep.subr.mxu0 0.0
        %535 = vmatpush1.msra.mxu0 0.0
        %536 = vmatprep.subr.mxu0 0.0
        %537 = vmatpush1.msra.mxu0 0.0
        %538 = vmatprep.subr.mxu0 0.0
        %539 = vmatpush1.msra.mxu0 0.0
        %540 = vmatprep.subr.mxu0 0.0
        %541 = vmatpush1.msra.mxu0 0.0
        %542 = vmatprep.subr.mxu0 0.0
        %543 = vmatpush1.msra.mxu0 0.0
        %544 = vmatprep.subr.mxu0 0.0
        %545 = vmatpush1.msra.mxu0 0.0
        %546 = vmatprep.subr.mxu0 0.0
        %547 = vmatpush1.msra.mxu0 0.0
        %548 = vmatprep.subr.mxu0 0.0
        %549 = vmatpush1.msra.mxu0 0.0
        %550 = vmatprep.subr.mxu0 0.0
        %551 = vmatpush1.msra.mxu0 0.0
        %552 = vmatprep.subr.mxu0 0.0
        %553 = vmatpush1.msra.mxu0 0.0
        %554 = vmatprep.subr.mxu0 0.0
        %555 = vmatpush1.msra.mxu0 0.0
        %556 = vmatprep.subr.mxu0 0.0
        %557 = vmatpush1.msra.mxu0 0.0
        %558 = vmatprep.mubr.f32.mxu0 0.0
        %559 = vmatmul.mubr.f32.gmra.mrb[0].mxu0 %v492
        %v560 = vpop.f32.mrb[0].mxu0
        %v561 = vadd.f32 0.0, %v560
        %v562 = vpop.f32.mrb[0].mxu0
        %v563 = vadd.f32 0.0, %v562
        %564 = vdwg.mxu0
        %565 = vmatprep.subr.mxu0 0.0
        %566 = vmatpush1.msra.mxu0 %v481
        %567 = vmatprep.subr.mxu0 0.0
        %568 = vmatpush1.msra.mxu0 %v484
        %569 = vmatprep.subr.mxu0 0.0
        %570 = vmatpush1.msra.mxu0 %v487
        %571 = vmatprep.subr.mxu0 0.0
        %572 = vmatpush1.msra.mxu0 %v490
        %573 = vmatprep.subr.mxu0 0.0
        %574 = vmatpush1.msra.mxu0 0.0
        %575 = vmatprep.subr.mxu0 0.0
        %576 = vmatpush1.msra.mxu0 0.0
        %577 = vmatprep.subr.mxu0 0.0
        %578 = vmatpush1.msra.mxu0 0.0
        %579 = vmatprep.subr.mxu0 0.0
        %580 = vmatpush1.msra.mxu0 0.0
        %581 = vmatprep.subr.mxu0 0.0
        %582 = vmatpush1.msra.mxu0 0.0
        %583 = vmatprep.subr.mxu0 0.0
        %584 = vmatpush1.msra.mxu0 0.0
        %585 = vmatprep.subr.mxu0 0.0
        %586 = vmatpush1.msra.mxu0 0.0
        %587 = vmatprep.subr.mxu0 0.0
        %588 = vmatpush1.msra.mxu0 0.0
        %589 = vmatprep.subr.mxu0 0.0
        %590 = vmatpush1.msra.mxu0 0.0
        %591 = vmatprep.subr.mxu0 0.0
        %592 = vmatpush1.msra.mxu0 0.0
        %593 = vmatprep.subr.mxu0 0.0
        %594 = vmatpush1.msra.mxu0 0.0
        %595 = vmatprep.subr.mxu0 0.0
        %596 = vmatpush1.msra.mxu0 0.0
        %597 = vmatprep.subr.mxu0 0.0
        %598 = vmatpush1.msra.mxu0 0.0
        %599 = vmatprep.subr.mxu0 0.0
        %600 = vmatpush1.msra.mxu0 0.0
        %601 = vmatprep.subr.mxu0 0.0
        %602 = vmatpush1.msra.mxu0 0.0
        %603 = vmatprep.subr.mxu0 0.0
        %604 = vmatpush1.msra.mxu0 0.0
        %605 = vmatprep.subr.mxu0 0.0
        %606 = vmatpush1.msra.mxu0 0.0
        %607 = vmatprep.subr.mxu0 0.0
        %608 = vmatpush1.msra.mxu0 0.0
        %609 = vmatprep.subr.mxu0 0.0
        %610 = vmatpush1.msra.mxu0 0.0
        %611 = vmatprep.subr.mxu0 0.0
        %612 = vmatpush1.msra.mxu0 0.0
        %613 = vmatprep.subr.mxu0 0.0
        %614 = vmatpush1.msra.mxu0 0.0
        %615 = vmatprep.subr.mxu0 0.0
        %616 = vmatpush1.msra.mxu0 0.0
        %617 = vmatprep.subr.mxu0 0.0
        %618 = vmatpush1.msra.mxu0 0.0
        %619 = vmatprep.subr.mxu0 0.0
        %620 = vmatpush1.msra.mxu0 0.0
        %621 = vmatprep.subr.mxu0 0.0
        %622 = vmatpush1.msra.mxu0 0.0
        %623 = vmatprep.subr.mxu0 0.0
        %624 = vmatpush1.msra.mxu0 0.0
        %625 = vmatprep.subr.mxu0 0.0
        %626 = vmatpush1.msra.mxu0 0.0
        %627 = vmatprep.subr.mxu0 0.0
        %628 = vmatpush1.msra.mxu0 0.0
        %629 = vmatprep.mubr.f32.mxu0 0.0
        %630 = vmatmul.mubr.f32.gmra.mrb[0].mxu0 %v492
        %v631 = vpop.f32.mrb[0].mxu0
        %v632 = vadd.f32 0.0, %v631
        %v633 = vpop.f32.mrb[0].mxu0
        %634 = vdwg.mxu0
        %v635 = vld [vmem:[%s451] sm:$0xff]
        %v636 = vld [vmem:[%s455] sm:$0xff]
        %v637 = vmul.f32 %v561, %v635
        %639 = vrot.lane.b32.xlu0 %v636, 64
        %v640 = vpop.permute.xlu0 %639
        %v642 = vmul.f32 %v561, %v640
        %644 = vrot.lane.b32.xlu0 %v642, 64
        %v645 = vpop.permute.xlu0 %644
        %v647 = vadd.f32 %v637, %v645
        %v648 = vmul.f32 %v563, %v635
        %v649 = vmul.f32 %v563, %v640
        %651 = vrot.lane.b32.xlu0 %v649, 64
        %v652 = vpop.permute.xlu0 %651
        %v654 = vadd.f32 %v648, %v652
        %v655 = vld [vmem:[%s459] sm:$0xff]
        %vm656 = vcmask 130048
        %v658 = vsel %vm656, %v647, 0
        %v661 = vsel %vm656, %v654, 0
        %663 = vmatprep.subr.mxu0 0.0
        %664 = vmatpush1.xpose.msra.mxu0 %v661
        %665 = vmatprep.subr.mxu0 0.0
        %666 = vmatpush1.xpose.msra.mxu0 0.0
        %667 = vmatprep.subr.mxu0 0.0
        %668 = vmatpush1.xpose.msra.mxu0 0.0
        %669 = vmatprep.subr.mxu0 0.0
        %670 = vmatpush1.xpose.msra.mxu0 0.0
        %671 = vmatprep.subr.mxu0 0.0
        %672 = vmatpush1.xpose.msra.mxu0 0.0
        %673 = vmatprep.subr.mxu0 0.0
        %674 = vmatpush1.xpose.msra.mxu0 0.0
        %675 = vmatprep.subr.mxu0 0.0
        %676 = vmatpush1.xpose.msra.mxu0 0.0
        %677 = vmatprep.subr.mxu0 0.0
        %678 = vmatpush1.xpose.msra.mxu0 0.0
        %679 = vmatprep.subr.mxu0 0.0
        %680 = vmatpush1.xpose.msra.mxu0 0.0
        %681 = vmatprep.subr.mxu0 0.0
        %682 = vmatpush1.xpose.msra.mxu0 0.0
        %683 = vmatprep.subr.mxu0 0.0
        %684 = vmatpush1.xpose.msra.mxu0 0.0
        %685 = vmatprep.subr.mxu0 0.0
        %686 = vmatpush1.xpose.msra.mxu0 0.0
        %687 = vmatprep.subr.mxu0 0.0
        %688 = vmatpush1.xpose.msra.mxu0 0.0
        %689 = vmatprep.subr.mxu0 0.0
        %690 = vmatpush1.xpose.msra.mxu0 0.0
        %691 = vmatprep.subr.mxu0 0.0
        %692 = vmatpush1.xpose.msra.mxu0 0.0
        %693 = vmatprep.subr.mxu0 0.0
        %694 = vmatpush1.xpose.msra.mxu0 0.0
        %695 = vmatprep.subr.mxu0 0.0
        %696 = vmatpush1.xpose.msra.mxu0 0.0
        %697 = vmatprep.subr.mxu0 0.0
        %698 = vmatpush1.xpose.msra.mxu0 0.0
        %699 = vmatprep.subr.mxu0 0.0
        %700 = vmatpush1.xpose.msra.mxu0 0.0
        %701 = vmatprep.subr.mxu0 0.0
        %702 = vmatpush1.xpose.msra.mxu0 0.0
        %703 = vmatprep.subr.mxu0 0.0
        %704 = vmatpush1.xpose.msra.mxu0 0.0
        %705 = vmatprep.subr.mxu0 0.0
        %706 = vmatpush1.xpose.msra.mxu0 0.0
        %707 = vmatprep.subr.mxu0 0.0
        %708 = vmatpush1.xpose.msra.mxu0 0.0
        %709 = vmatprep.subr.mxu0 0.0
        %710 = vmatpush1.xpose.msra.mxu0 0.0
        %711 = vmatprep.subr.mxu0 0.0
        %712 = vmatpush1.xpose.msra.mxu0 0.0
        %713 = vmatprep.subr.mxu0 0.0
        %714 = vmatpush1.xpose.msra.mxu0 0.0
        %715 = vmatprep.subr.mxu0 0.0
        %716 = vmatpush1.xpose.msra.mxu0 0.0
        %717 = vmatprep.subr.mxu0 0.0
        %718 = vmatpush1.xpose.msra.mxu0 0.0
        %719 = vmatprep.subr.mxu0 0.0
        %720 = vmatpush1.xpose.msra.mxu0 0.0
        %721 = vmatprep.subr.mxu0 0.0
        %722 = vmatpush1.xpose.msra.mxu0 0.0
        %723 = vmatprep.subr.mxu0 0.0
        %724 = vmatpush1.xpose.msra.mxu0 0.0
        %725 = vmatprep.subr.mxu0 0.0
        %726 = vmatpush1.xpose.msra.mxu0 0.0
        %727 = vmatprep.mubr.f32.mxu0 0.0
        %728 = vmatmul.mubr.f32.gmra.mrb[0].mxu0 %v658
        %v729 = vpop.f32.mrb[0].mxu0
        %v730 = vadd.f32 %v655, %v729
        %v731 = vpop.f32.mrb[0].mxu0
        %732 = vdwg.mxu0
        %vm733 = vcmask 64512
        %v734 = vsel %vm733, %v730, -inf
        %735 = vmax.xlane.f32.xlu0 %v734
        %v736 = vpop.xlane.xlu0 %735
        %v737 = vsub.f32 %v730, %v736
        %v738 = vmul.f32 %v737, 1.442695
        %v739 = vpow.pop %v738
        %v740 = vsel %vm733, %v739, 0.0
        %741 = vadd.xlane.f32.xlu0 %v740
        %v742 = vpop.xlane.xlu0 %741
        %v743 = vrcp.pop %v742
        %v744 = vmul.f32 %v739, %v743
        %v746 = vsel %vm733, %v744, 0
        %748 = vmatprep.subr.mxu0 0.0
        %749 = vmatpush1.msra.mxu0 %v632
        %750 = vmatprep.subr.mxu0 0.0
        %751 = vmatpush1.msra.mxu0 0.0
        %752 = vmatprep.subr.mxu0 0.0
        %753 = vmatpush1.msra.mxu0 0.0
        %754 = vmatprep.subr.mxu0 0.0
        %755 = vmatpush1.msra.mxu0 0.0
        %756 = vmatprep.subr.mxu0 0.0
        %757 = vmatpush1.msra.mxu0 0.0
        %758 = vmatprep.subr.mxu0 0.0
        %759 = vmatpush1.msra.mxu0 0.0
        %760 = vmatprep.subr.mxu0 0.0
        %761 = vmatpush1.msra.mxu0 0.0
        %762 = vmatprep.subr.mxu0 0.0
        %763 = vmatpush1.msra.mxu0 0.0
        %764 = vmatprep.subr.mxu0 0.0
        %765 = vmatpush1.msra.mxu0 0.0
        %766 = vmatprep.subr.mxu0 0.0
        %767 = vmatpush1.msra.mxu0 0.0
        %768 = vmatprep.subr.mxu0 0.0
        %769 = vmatpush1.msra.mxu0 0.0
        %770 = vmatprep.subr.mxu0 0.0
        %771 = vmatpush1.msra.mxu0 0.0
        %772 = vmatprep.subr.mxu0 0.0
        %773 = vmatpush1.msra.mxu0 0.0
        %774 = vmatprep.subr.mxu0 0.0
        %775 = vmatpush1.msra.mxu0 0.0
        %776 = vmatprep.subr.mxu0 0.0
        %777 = vmatpush1.msra.mxu0 0.0
        %778 = vmatprep.subr.mxu0 0.0
        %779 = vmatpush1.msra.mxu0 0.0
        %780 = vmatprep.subr.mxu0 0.0
        %781 = vmatpush1.msra.mxu0 0.0
        %782 = vmatprep.subr.mxu0 0.0
        %783 = vmatpush1.msra.mxu0 0.0
        %784 = vmatprep.subr.mxu0 0.0
        %785 = vmatpush1.msra.mxu0 0.0
        %786 = vmatprep.subr.mxu0 0.0
        %787 = vmatpush1.msra.mxu0 0.0
        %788 = vmatprep.subr.mxu0 0.0
        %789 = vmatpush1.msra.mxu0 0.0
        %790 = vmatprep.subr.mxu0 0.0
        %791 = vmatpush1.msra.mxu0 0.0
        %792 = vmatprep.subr.mxu0 0.0
        %793 = vmatpush1.msra.mxu0 0.0
        %794 = vmatprep.subr.mxu0 0.0
        %795 = vmatpush1.msra.mxu0 0.0
        %796 = vmatprep.subr.mxu0 0.0
        %797 = vmatpush1.msra.mxu0 0.0
        %798 = vmatprep.subr.mxu0 0.0
        %799 = vmatpush1.msra.mxu0 0.0
        %800 = vmatprep.subr.mxu0 0.0
        %801 = vmatpush1.msra.mxu0 0.0
        %802 = vmatprep.subr.mxu0 0.0
        %803 = vmatpush1.msra.mxu0 0.0
        %804 = vmatprep.subr.mxu0 0.0
        %805 = vmatpush1.msra.mxu0 0.0
        %806 = vmatprep.subr.mxu0 0.0
        %807 = vmatpush1.msra.mxu0 0.0
        %808 = vmatprep.subr.mxu0 0.0
        %809 = vmatpush1.msra.mxu0 0.0
        %810 = vmatprep.subr.mxu0 0.0
        %811 = vmatpush1.msra.mxu0 0.0
        %812 = vmatprep.mubr.f32.mxu0 0.0
        %813 = vmatmul.mubr.f32.gmra.mrb[0].mxu0 %v746
        %v814 = vpop.f32.mrb[0].mxu0
        %v815 = vadd.f32 0.0, %v814
        %v816 = vpop.f32.mrb[0].mxu0
        %817 = vdwg.mxu0
        %v818 = vld [vmem:[%s4] sm:$0xff]
        %v819 = vld [vmem:[%s4 + $0x8] sm:$0xff]
        %v821 = vsel %vm656, %v815, 0
        %823 = vmatprep.subr.mxu0 0.0
        %824 = vmatpush1.msra.mxu0 %v818
        %825 = vmatprep.subr.mxu0 0.0
        %826 = vmatpush1.msra.mxu0 %v819
        %827 = vmatprep.subr.mxu0 0.0
        %828 = vmatpush1.msra.mxu0 0.0
        %829 = vmatprep.subr.mxu0 0.0
        %830 = vmatpush1.msra.mxu0 0.0
        %831 = vmatprep.subr.mxu0 0.0
        %832 = vmatpush1.msra.mxu0 0.0
        %833 = vmatprep.subr.mxu0 0.0
        %834 = vmatpush1.msra.mxu0 0.0
        %835 = vmatprep.subr.mxu0 0.0
        %836 = vmatpush1.msra.mxu0 0.0
        %837 = vmatprep.subr.mxu0 0.0
        %838 = vmatpush1.msra.mxu0 0.0
        %839 = vmatprep.subr.mxu0 0.0
        %840 = vmatpush1.msra.mxu0 0.0
        %841 = vmatprep.subr.mxu0 0.0
        %842 = vmatpush1.msra.mxu0 0.0
        %843 = vmatprep.subr.mxu0 0.0
        %844 = vmatpush1.msra.mxu0 0.0
        %845 = vmatprep.subr.mxu0 0.0
        %846 = vmatpush1.msra.mxu0 0.0
        %847 = vmatprep.subr.mxu0 0.0
        %848 = vmatpush1.msra.mxu0 0.0
        %849 = vmatprep.subr.mxu0 0.0
        %850 = vmatpush1.msra.mxu0 0.0
        %851 = vmatprep.subr.mxu0 0.0
        %852 = vmatpush1.msra.mxu0 0.0
        %853 = vmatprep.subr.mxu0 0.0
        %854 = vmatpush1.msra.mxu0 0.0
        %855 = vmatprep.subr.mxu0 0.0
        %856 = vmatpush1.msra.mxu0 0.0
        %857 = vmatprep.subr.mxu0 0.0
        %858 = vmatpush1.msra.mxu0 0.0
        %859 = vmatprep.subr.mxu0 0.0
        %860 = vmatpush1.msra.mxu0 0.0
        %861 = vmatprep.subr.mxu0 0.0
        %862 = vmatpush1.msra.mxu0 0.0
        %863 = vmatprep.subr.mxu0 0.0
        %864 = vmatpush1.msra.mxu0 0.0
        %865 = vmatprep.subr.mxu0 0.0
        %866 = vmatpush1.msra.mxu0 0.0
        %867 = vmatprep.subr.mxu0 0.0
        %868 = vmatpush1.msra.mxu0 0.0
        %869 = vmatprep.subr.mxu0 0.0
        %870 = vmatpush1.msra.mxu0 0.0
        %871 = vmatprep.subr.mxu0 0.0
        %872 = vmatpush1.msra.mxu0 0.0
        %873 = vmatprep.subr.mxu0 0.0
        %874 = vmatpush1.msra.mxu0 0.0
        %875 = vmatprep.subr.mxu0 0.0
        %876 = vmatpush1.msra.mxu0 0.0
        %877 = vmatprep.subr.mxu0 0.0
        %878 = vmatpush1.msra.mxu0 0.0
        %879 = vmatprep.subr.mxu0 0.0
        %880 = vmatpush1.msra.mxu0 0.0
        %881 = vmatprep.subr.mxu0 0.0
        %882 = vmatpush1.msra.mxu0 0.0
        %883 = vmatprep.subr.mxu0 0.0
        %884 = vmatpush1.msra.mxu0 0.0
        %885 = vmatprep.subr.mxu0 0.0
        %886 = vmatpush1.msra.mxu0 0.0
        %887 = vmatprep.mubr.f32.mxu0 0.0
        %888 = vmatmul.mubr.f32.gmra.mrb[0].mxu0 %v821
        %v889 = vpop.f32.mrb[0].mxu0
        %v890 = vadd.f32 0.0, %v889
        %v891 = vpop.f32.mrb[0].mxu0
        %892 = vdwg.mxu0
        %v893 = vadd.f32 %v460, %v890
        %894 = vrot.lane.b32.xlu0 %v647, 112
        %v895 = vpop.permute.xlu0 %894
        %896 = vrot.lane.b32.xlu0 %v654, 112
        %v897 = vpop.permute.xlu0 %896
        %v898 = vsel %vm656, %v895, 0
        %v900 = vsel %vm656, %v897, 0
        %902 = vmatprep.subr.mxu0 0.0
        %903 = vmatpush1.xpose.msra.mxu0 %v900
        %904 = vmatprep.subr.mxu0 0.0
        %905 = vmatpush1.xpose.msra.mxu0 0.0
        %906 = vmatprep.subr.mxu0 0.0
        %907 = vmatpush1.xpose.msra.mxu0 0.0
        %908 = vmatprep.subr.mxu0 0.0
        %909 = vmatpush1.xpose.msra.mxu0 0.0
        %910 = vmatprep.subr.mxu0 0.0
        %911 = vmatpush1.xpose.msra.mxu0 0.0
        %912 = vmatprep.subr.mxu0 0.0
        %913 = vmatpush1.xpose.msra.mxu0 0.0
        %914 = vmatprep.subr.mxu0 0.0
        %915 = vmatpush1.xpose.msra.mxu0 0.0
        %916 = vmatprep.subr.mxu0 0.0
        %917 = vmatpush1.xpose.msra.mxu0 0.0
        %918 = vmatprep.subr.mxu0 0.0
        %919 = vmatpush1.xpose.msra.mxu0 0.0
        %920 = vmatprep.subr.mxu0 0.0
        %921 = vmatpush1.xpose.msra.mxu0 0.0
        %922 = vmatprep.subr.mxu0 0.0
        %923 = vmatpush1.xpose.msra.mxu0 0.0
        %924 = vmatprep.subr.mxu0 0.0
        %925 = vmatpush1.xpose.msra.mxu0 0.0
        %926 = vmatprep.subr.mxu0 0.0
        %927 = vmatpush1.xpose.msra.mxu0 0.0
        %928 = vmatprep.subr.mxu0 0.0
        %929 = vmatpush1.xpose.msra.mxu0 0.0
        %930 = vmatprep.subr.mxu0 0.0
        %931 = vmatpush1.xpose.msra.mxu0 0.0
        %932 = vmatprep.subr.mxu0 0.0
        %933 = vmatpush1.xpose.msra.mxu0 0.0
        %934 = vmatprep.subr.mxu0 0.0
        %935 = vmatpush1.xpose.msra.mxu0 0.0
        %936 = vmatprep.subr.mxu0 0.0
        %937 = vmatpush1.xpose.msra.mxu0 0.0
        %938 = vmatprep.subr.mxu0 0.0
        %939 = vmatpush1.xpose.msra.mxu0 0.0
        %940 = vmatprep.subr.mxu0 0.0
        %941 = vmatpush1.xpose.msra.mxu0 0.0
        %942 = vmatprep.subr.mxu0 0.0
        %943 = vmatpush1.xpose.msra.mxu0 0.0
        %944 = vmatprep.subr.mxu0 0.0
        %945 = vmatpush1.xpose.msra.mxu0 0.0
        %946 = vmatprep.subr.mxu0 0.0
        %947 = vmatpush1.xpose.msra.mxu0 0.0
        %948 = vmatprep.subr.mxu0 0.0
        %949 = vmatpush1.xpose.msra.mxu0 0.0
        %950 = vmatprep.subr.mxu0 0.0
        %951 = vmatpush1.xpose.msra.mxu0 0.0
        %952 = vmatprep.subr.mxu0 0.0
        %953 = vmatpush1.xpose.msra.mxu0 0.0
        %954 = vmatprep.subr.mxu0 0.0
        %955 = vmatpush1.xpose.msra.mxu0 0.0
        %956 = vmatprep.subr.mxu0 0.0
        %957 = vmatpush1.xpose.msra.mxu0 0.0
        %958 = vmatprep.subr.mxu0 0.0
        %959 = vmatpush1.xpose.msra.mxu0 0.0
        %960 = vmatprep.subr.mxu0 0.0
        %961 = vmatpush1.xpose.msra.mxu0 0.0
        %962 = vmatprep.subr.mxu0 0.0
        %963 = vmatpush1.xpose.msra.mxu0 0.0
        %964 = vmatprep.subr.mxu0 0.0
        %965 = vmatpush1.xpose.msra.mxu0 0.0
        %966 = vmatprep.mubr.f32.mxu0 0.0
        %967 = vmatmul.mubr.f32.gmra.mrb[0].mxu0 %v898
        %v968 = vpop.f32.mrb[0].mxu0
        %v969 = vadd.f32 %v655, %v968
        %v970 = vpop.f32.mrb[0].mxu0
        %971 = vdwg.mxu0
        %v972 = vsel %vm733, %v969, -inf
        %973 = vmax.xlane.f32.xlu0 %v972
        %v974 = vpop.xlane.xlu0 %973
        %v975 = vsub.f32 %v969, %v974
        %v976 = vmul.f32 %v975, 1.442695
        %v977 = vpow.pop %v976
        %v978 = vsel %vm733, %v977, 0.0
        %979 = vadd.xlane.f32.xlu0 %v978
        %v980 = vpop.xlane.xlu0 %979
        %v981 = vrcp.pop %v980
        %v982 = vmul.f32 %v977, %v981
        %984 = vrot.lane.b32.xlu0 %v632, 112
        %v985 = vpop.permute.xlu0 %984
        %v988 = vsel %vm733, %v982, 0
        %990 = vmatprep.subr.mxu0 0.0
        %991 = vmatpush1.msra.mxu0 %v985
        %992 = vmatprep.subr.mxu0 0.0
        %993 = vmatpush1.msra.mxu0 0.0
        %994 = vmatprep.subr.mxu0 0.0
        %995 = vmatpush1.msra.mxu0 0.0
        %996 = vmatprep.subr.mxu0 0.0
        %997 = vmatpush1.msra.mxu0 0.0
        %998 = vmatprep.subr.mxu0 0.0
        %999 = vmatpush1.msra.mxu0 0.0
        %1000 = vmatprep.subr.mxu0 0.0
        %1001 = vmatpush1.msra.mxu0 0.0
        %1002 = vmatprep.subr.mxu0 0.0
        %1003 = vmatpush1.msra.mxu0 0.0
        %1004 = vmatprep.subr.mxu0 0.0
        %1005 = vmatpush1.msra.mxu0 0.0
        %1006 = vmatprep.subr.mxu0 0.0
        %1007 = vmatpush1.msra.mxu0 0.0
        %1008 = vmatprep.subr.mxu0 0.0
        %1009 = vmatpush1.msra.mxu0 0.0
        %1010 = vmatprep.subr.mxu0 0.0
        %1011 = vmatpush1.msra.mxu0 0.0
        %1012 = vmatprep.subr.mxu0 0.0
        %1013 = vmatpush1.msra.mxu0 0.0
        %1014 = vmatprep.subr.mxu0 0.0
        %1015 = vmatpush1.msra.mxu0 0.0
        %1016 = vmatprep.subr.mxu0 0.0
        %1017 = vmatpush1.msra.mxu0 0.0
        %1018 = vmatprep.subr.mxu0 0.0
        %1019 = vmatpush1.msra.mxu0 0.0
        %1020 = vmatprep.subr.mxu0 0.0
        %1021 = vmatpush1.msra.mxu0 0.0
        %1022 = vmatprep.subr.mxu0 0.0
        %1023 = vmatpush1.msra.mxu0 0.0
        %1024 = vmatprep.subr.mxu0 0.0
        %1025 = vmatpush1.msra.mxu0 0.0
        %1026 = vmatprep.subr.mxu0 0.0
        %1027 = vmatpush1.msra.mxu0 0.0
        %1028 = vmatprep.subr.mxu0 0.0
        %1029 = vmatpush1.msra.mxu0 0.0
        %1030 = vmatprep.subr.mxu0 0.0
        %1031 = vmatpush1.msra.mxu0 0.0
        %1032 = vmatprep.subr.mxu0 0.0
        %1033 = vmatpush1.msra.mxu0 0.0
        %1034 = vmatprep.subr.mxu0 0.0
        %1035 = vmatpush1.msra.mxu0 0.0
        %1036 = vmatprep.subr.mxu0 0.0
        %1037 = vmatpush1.msra.mxu0 0.0
        %1038 = vmatprep.subr.mxu0 0.0
        %1039 = vmatpush1.msra.mxu0 0.0
        %1040 = vmatprep.subr.mxu0 0.0
        %1041 = vmatpush1.msra.mxu0 0.0
        %1042 = vmatprep.subr.mxu0 0.0
        %1043 = vmatpush1.msra.mxu0 0.0
        %1044 = vmatprep.subr.mxu0 0.0
        %1045 = vmatpush1.msra.mxu0 0.0
        %1046 = vmatprep.subr.mxu0 0.0
        %1047 = vmatpush1.msra.mxu0 0.0
        %1048 = vmatprep.subr.mxu0 0.0
        %1049 = vmatpush1.msra.mxu0 0.0
        %1050 = vmatprep.subr.mxu0 0.0
        %1051 = vmatpush1.msra.mxu0 0.0
        %1052 = vmatprep.subr.mxu0 0.0
        %1053 = vmatpush1.msra.mxu0 0.0
        %1054 = vmatprep.mubr.f32.mxu0 0.0
        %1055 = vmatmul.mubr.f32.gmra.mrb[0].mxu0 %v988
        %v1056 = vpop.f32.mrb[0].mxu0
        %v1057 = vadd.f32 0.0, %v1056
        %v1058 = vpop.f32.mrb[0].mxu0
        %1059 = vdwg.mxu0
        %v1060 = vld [vmem:[%s4 + $0x10] sm:$0xff]
        %v1061 = vld [vmem:[%s4 + $0x18] sm:$0xff]
        %v1063 = vsel %vm656, %v1057, 0
        %1065 = vmatprep.subr.mxu0 0.0
        %1066 = vmatpush1.msra.mxu0 %v1060
        %1067 = vmatprep.subr.mxu0 0.0
        %1068 = vmatpush1.msra.mxu0 %v1061
        %1069 = vmatprep.subr.mxu0 0.0
        %1070 = vmatpush1.msra.mxu0 0.0
        %1071 = vmatprep.subr.mxu0 0.0
        %1072 = vmatpush1.msra.mxu0 0.0
        %1073 = vmatprep.subr.mxu0 0.0
        %1074 = vmatpush1.msra.mxu0 0.0
        %1075 = vmatprep.subr.mxu0 0.0
        %1076 = vmatpush1.msra.mxu0 0.0
        %1077 = vmatprep.subr.mxu0 0.0
        %1078 = vmatpush1.msra.mxu0 0.0
        %1079 = vmatprep.subr.mxu0 0.0
        %1080 = vmatpush1.msra.mxu0 0.0
        %1081 = vmatprep.subr.mxu0 0.0
        %1082 = vmatpush1.msra.mxu0 0.0
        %1083 = vmatprep.subr.mxu0 0.0
        %1084 = vmatpush1.msra.mxu0 0.0
        %1085 = vmatprep.subr.mxu0 0.0
        %1086 = vmatpush1.msra.mxu0 0.0
        %1087 = vmatprep.subr.mxu0 0.0
        %1088 = vmatpush1.msra.mxu0 0.0
        %1089 = vmatprep.subr.mxu0 0.0
        %1090 = vmatpush1.msra.mxu0 0.0
        %1091 = vmatprep.subr.mxu0 0.0
        %1092 = vmatpush1.msra.mxu0 0.0
        %1093 = vmatprep.subr.mxu0 0.0
        %1094 = vmatpush1.msra.mxu0 0.0
        %1095 = vmatprep.subr.mxu0 0.0
        %1096 = vmatpush1.msra.mxu0 0.0
        %1097 = vmatprep.subr.mxu0 0.0
        %1098 = vmatpush1.msra.mxu0 0.0
        %1099 = vmatprep.subr.mxu0 0.0
        %1100 = vmatpush1.msra.mxu0 0.0
        %1101 = vmatprep.subr.mxu0 0.0
        %1102 = vmatpush1.msra.mxu0 0.0
        %1103 = vmatprep.subr.mxu0 0.0
        %1104 = vmatpush1.msra.mxu0 0.0
        %1105 = vmatprep.subr.mxu0 0.0
        %1106 = vmatpush1.msra.mxu0 0.0
        %1107 = vmatprep.subr.mxu0 0.0
        %1108 = vmatpush1.msra.mxu0 0.0
        %1109 = vmatprep.subr.mxu0 0.0
        %1110 = vmatpush1.msra.mxu0 0.0
        %1111 = vmatprep.subr.mxu0 0.0
        %1112 = vmatpush1.msra.mxu0 0.0
        %1113 = vmatprep.subr.mxu0 0.0
        %1114 = vmatpush1.msra.mxu0 0.0
        %1115 = vmatprep.subr.mxu0 0.0
        %1116 = vmatpush1.msra.mxu0 0.0
        %1117 = vmatprep.subr.mxu0 0.0
        %1118 = vmatpush1.msra.mxu0 0.0
        %1119 = vmatprep.subr.mxu0 0.0
        %1120 = vmatpush1.msra.mxu0 0.0
        %1121 = vmatprep.subr.mxu0 0.0
        %1122 = vmatpush1.msra.mxu0 0.0
        %1123 = vmatprep.subr.mxu0 0.0
        %1124 = vmatpush1.msra.mxu0 0.0
        %1125 = vmatprep.subr.mxu0 0.0
        %1126 = vmatpush1.msra.mxu0 0.0
        %1127 = vmatprep.subr.mxu0 0.0
        %1128 = vmatpush1.msra.mxu0 0.0
        %1129 = vmatprep.mubr.f32.mxu0 0.0
        %1130 = vmatmul.mubr.f32.gmra.mrb[0].mxu0 %v1063
        %v1131 = vpop.f32.mrb[0].mxu0
        %v1132 = vadd.f32 0.0, %v1131
        %v1133 = vpop.f32.mrb[0].mxu0
        %1134 = vdwg.mxu0
        %v1135 = vadd.f32 %v893, %v1132
        %1136 = vrot.lane.b32.xlu0 %v647, 96
        %v1137 = vpop.permute.xlu0 %1136
        %1138 = vrot.lane.b32.xlu0 %v654, 96
        %v1139 = vpop.permute.xlu0 %1138
        %v1140 = vsel %vm656, %v1137, 0
        %v1142 = vsel %vm656, %v1139, 0
        %1144 = vmatprep.subr.mxu0 0.0
        %1145 = vmatpush1.xpose.msra.mxu0 %v1142
        %1146 = vmatprep.subr.mxu0 0.0
        %1147 = vmatpush1.xpose.msra.mxu0 0.0
        %1148 = vmatprep.subr.mxu0 0.0
        %1149 = vmatpush1.xpose.msra.mxu0 0.0
        %1150 = vmatprep.subr.mxu0 0.0
        %1151 = vmatpush1.xpose.msra.mxu0 0.0
        %1152 = vmatprep.subr.mxu0 0.0
        %1153 = vmatpush1.xpose.msra.mxu0 0.0
        %1154 = vmatprep.subr.mxu0 0.0
        %1155 = vmatpush1.xpose.msra.mxu0 0.0
        %1156 = vmatprep.subr.mxu0 0.0
        %1157 = vmatpush1.xpose.msra.mxu0 0.0
        %1158 = vmatprep.subr.mxu0 0.0
        %1159 = vmatpush1.xpose.msra.mxu0 0.0
        %1160 = vmatprep.subr.mxu0 0.0
        %1161 = vmatpush1.xpose.msra.mxu0 0.0
        %1162 = vmatprep.subr.mxu0 0.0
        %1163 = vmatpush1.xpose.msra.mxu0 0.0
        %1164 = vmatprep.subr.mxu0 0.0
        %1165 = vmatpush1.xpose.msra.mxu0 0.0
        %1166 = vmatprep.subr.mxu0 0.0
        %1167 = vmatpush1.xpose.msra.mxu0 0.0
        %1168 = vmatprep.subr.mxu0 0.0
        %1169 = vmatpush1.xpose.msra.mxu0 0.0
        %1170 = vmatprep.subr.mxu0 0.0
        %1171 = vmatpush1.xpose.msra.mxu0 0.0
        %1172 = vmatprep.subr.mxu0 0.0
        %1173 = vmatpush1.xpose.msra.mxu0 0.0
        %1174 = vmatprep.subr.mxu0 0.0
        %1175 = vmatpush1.xpose.msra.mxu0 0.0
        %1176 = vmatprep.subr.mxu0 0.0
        %1177 = vmatpush1.xpose.msra.mxu0 0.0
        %1178 = vmatprep.subr.mxu0 0.0
        %1179 = vmatpush1.xpose.msra.mxu0 0.0
        %1180 = vmatprep.subr.mxu0 0.0
        %1181 = vmatpush1.xpose.msra.mxu0 0.0
        %1182 = vmatprep.subr.mxu0 0.0
        %1183 = vmatpush1.xpose.msra.mxu0 0.0
        %1184 = vmatprep.subr.mxu0 0.0
        %1185 = vmatpush1.xpose.msra.mxu0 0.0
        %1186 = vmatprep.subr.mxu0 0.0
        %1187 = vmatpush1.xpose.msra.mxu0 0.0
        %1188 = vmatprep.subr.mxu0 0.0
        %1189 = vmatpush1.xpose.msra.mxu0 0.0
        %1190 = vmatprep.subr.mxu0 0.0
        %1191 = vmatpush1.xpose.msra.mxu0 0.0
        %1192 = vmatprep.subr.mxu0 0.0
        %1193 = vmatpush1.xpose.msra.mxu0 0.0
        %1194 = vmatprep.subr.mxu0 0.0
        %1195 = vmatpush1.xpose.msra.mxu0 0.0
        %1196 = vmatprep.subr.mxu0 0.0
        %1197 = vmatpush1.xpose.msra.mxu0 0.0
        %1198 = vmatprep.subr.mxu0 0.0
        %1199 = vmatpush1.xpose.msra.mxu0 0.0
        %1200 = vmatprep.subr.mxu0 0.0
        %1201 = vmatpush1.xpose.msra.mxu0 0.0
        %1202 = vmatprep.subr.mxu0 0.0
        %1203 = vmatpush1.xpose.msra.mxu0 0.0
        %1204 = vmatprep.subr.mxu0 0.0
        %1205 = vmatpush1.xpose.msra.mxu0 0.0
        %1206 = vmatprep.subr.mxu0 0.0
        %1207 = vmatpush1.xpose.msra.mxu0 0.0
        %1208 = vmatprep.mubr.f32.mxu0 0.0
        %1209 = vmatmul.mubr.f32.gmra.mrb[0].mxu0 %v1140
        %v1210 = vpop.f32.mrb[0].mxu0
        %v1211 = vadd.f32 %v655, %v1210
        %v1212 = vpop.f32.mrb[0].mxu0
        %1213 = vdwg.mxu0
        %v1214 = vsel %vm733, %v1211, -inf
        %1215 = vmax.xlane.f32.xlu0 %v1214
        %v1216 = vpop.xlane.xlu0 %1215
        %v1217 = vsub.f32 %v1211, %v1216
        %v1218 = vmul.f32 %v1217, 1.442695
        %v1219 = vpow.pop %v1218
        %v1220 = vsel %vm733, %v1219, 0.0
        %1221 = vadd.xlane.f32.xlu0 %v1220
        %v1222 = vpop.xlane.xlu0 %1221
        %v1223 = vrcp.pop %v1222
        %v1224 = vmul.f32 %v1219, %v1223
        %1225 = vrot.lane.b32.xlu0 %v632, 96
        %v1226 = vpop.permute.xlu0 %1225
        %v1229 = vsel %vm733, %v1224, 0
        %1231 = vmatprep.subr.mxu0 0.0
        %1232 = vmatpush1.msra.mxu0 %v1226
        %1233 = vmatprep.subr.mxu0 0.0
        %1234 = vmatpush1.msra.mxu0 0.0
        %1235 = vmatprep.subr.mxu0 0.0
        %1236 = vmatpush1.msra.mxu0 0.0
        %1237 = vmatprep.subr.mxu0 0.0
        %1238 = vmatpush1.msra.mxu0 0.0
        %1239 = vmatprep.subr.mxu0 0.0
        %1240 = vmatpush1.msra.mxu0 0.0
        %1241 = vmatprep.subr.mxu0 0.0
        %1242 = vmatpush1.msra.mxu0 0.0
        %1243 = vmatprep.subr.mxu0 0.0
        %1244 = vmatpush1.msra.mxu0 0.0
        %1245 = vmatprep.subr.mxu0 0.0
        %1246 = vmatpush1.msra.mxu0 0.0
        %1247 = vmatprep.subr.mxu0 0.0
        %1248 = vmatpush1.msra.mxu0 0.0
        %1249 = vmatprep.subr.mxu0 0.0
        %1250 = vmatpush1.msra.mxu0 0.0
        %1251 = vmatprep.subr.mxu0 0.0
        %1252 = vmatpush1.msra.mxu0 0.0
        %1253 = vmatprep.subr.mxu0 0.0
        %1254 = vmatpush1.msra.mxu0 0.0
        %1255 = vmatprep.subr.mxu0 0.0
        %1256 = vmatpush1.msra.mxu0 0.0
        %1257 = vmatprep.subr.mxu0 0.0
        %1258 = vmatpush1.msra.mxu0 0.0
        %1259 = vmatprep.subr.mxu0 0.0
        %1260 = vmatpush1.msra.mxu0 0.0
        %1261 = vmatprep.subr.mxu0 0.0
        %1262 = vmatpush1.msra.mxu0 0.0
        %1263 = vmatprep.subr.mxu0 0.0
        %1264 = vmatpush1.msra.mxu0 0.0
        %1265 = vmatprep.subr.mxu0 0.0
        %1266 = vmatpush1.msra.mxu0 0.0
        %1267 = vmatprep.subr.mxu0 0.0
        %1268 = vmatpush1.msra.mxu0 0.0
        %1269 = vmatprep.subr.mxu0 0.0
        %1270 = vmatpush1.msra.mxu0 0.0
        %1271 = vmatprep.subr.mxu0 0.0
        %1272 = vmatpush1.msra.mxu0 0.0
        %1273 = vmatprep.subr.mxu0 0.0
        %1274 = vmatpush1.msra.mxu0 0.0
        %1275 = vmatprep.subr.mxu0 0.0
        %1276 = vmatpush1.msra.mxu0 0.0
        %1277 = vmatprep.subr.mxu0 0.0
        %1278 = vmatpush1.msra.mxu0 0.0
        %1279 = vmatprep.subr.mxu0 0.0
        %1280 = vmatpush1.msra.mxu0 0.0
        %1281 = vmatprep.subr.mxu0 0.0
        %1282 = vmatpush1.msra.mxu0 0.0
        %1283 = vmatprep.subr.mxu0 0.0
        %1284 = vmatpush1.msra.mxu0 0.0
        %1285 = vmatprep.subr.mxu0 0.0
        %1286 = vmatpush1.msra.mxu0 0.0
        %1287 = vmatprep.subr.mxu0 0.0
        %1288 = vmatpush1.msra.mxu0 0.0
        %1289 = vmatprep.subr.mxu0 0.0
        %1290 = vmatpush1.msra.mxu0 0.0
        %1291 = vmatprep.subr.mxu0 0.0
        %1292 = vmatpush1.msra.mxu0 0.0
        %1293 = vmatprep.subr.mxu0 0.0
        %1294 = vmatpush1.msra.mxu0 0.0
        %1295 = vmatprep.mubr.f32.mxu0 0.0
        %1296 = vmatmul.mubr.f32.gmra.mrb[0].mxu0 %v1229
        %v1297 = vpop.f32.mrb[0].mxu0
        %v1298 = vadd.f32 0.0, %v1297
        %v1299 = vpop.f32.mrb[0].mxu0
        %1300 = vdwg.mxu0
        %v1301 = vld [vmem:[%s4 + $0x20] sm:$0xff]
        %v1302 = vld [vmem:[%s4 + $0x28] sm:$0xff]
        %v1304 = vsel %vm656, %v1298, 0
        %1306 = vmatprep.subr.mxu0 0.0
        %1307 = vmatpush1.msra.mxu0 %v1301
        %1308 = vmatprep.subr.mxu0 0.0
        %1309 = vmatpush1.msra.mxu0 %v1302
        %1310 = vmatprep.subr.mxu0 0.0
        %1311 = vmatpush1.msra.mxu0 0.0
        %1312 = vmatprep.subr.mxu0 0.0
        %1313 = vmatpush1.msra.mxu0 0.0
        %1314 = vmatprep.subr.mxu0 0.0
        %1315 = vmatpush1.msra.mxu0 0.0
        %1316 = vmatprep.subr.mxu0 0.0
        %1317 = vmatpush1.msra.mxu0 0.0
        %1318 = vmatprep.subr.mxu0 0.0
        %1319 = vmatpush1.msra.mxu0 0.0
        %1320 = vmatprep.subr.mxu0 0.0
        %1321 = vmatpush1.msra.mxu0 0.0
        %1322 = vmatprep.subr.mxu0 0.0
        %1323 = vmatpush1.msra.mxu0 0.0
        %1324 = vmatprep.subr.mxu0 0.0
        %1325 = vmatpush1.msra.mxu0 0.0
        %1326 = vmatprep.subr.mxu0 0.0
        %1327 = vmatpush1.msra.mxu0 0.0
        %1328 = vmatprep.subr.mxu0 0.0
        %1329 = vmatpush1.msra.mxu0 0.0
        %1330 = vmatprep.subr.mxu0 0.0
        %1331 = vmatpush1.msra.mxu0 0.0
        %1332 = vmatprep.subr.mxu0 0.0
        %1333 = vmatpush1.msra.mxu0 0.0
        %1334 = vmatprep.subr.mxu0 0.0
        %1335 = vmatpush1.msra.mxu0 0.0
        %1336 = vmatprep.subr.mxu0 0.0
        %1337 = vmatpush1.msra.mxu0 0.0
        %1338 = vmatprep.subr.mxu0 0.0
        %1339 = vmatpush1.msra.mxu0 0.0
        %1340 = vmatprep.subr.mxu0 0.0
        %1341 = vmatpush1.msra.mxu0 0.0
        %1342 = vmatprep.subr.mxu0 0.0
        %1343 = vmatpush1.msra.mxu0 0.0
        %1344 = vmatprep.subr.mxu0 0.0
        %1345 = vmatpush1.msra.mxu0 0.0
        %1346 = vmatprep.subr.mxu0 0.0
        %1347 = vmatpush1.msra.mxu0 0.0
        %1348 = vmatprep.subr.mxu0 0.0
        %1349 = vmatpush1.msra.mxu0 0.0
        %1350 = vmatprep.subr.mxu0 0.0
        %1351 = vmatpush1.msra.mxu0 0.0
        %1352 = vmatprep.subr.mxu0 0.0
        %1353 = vmatpush1.msra.mxu0 0.0
        %1354 = vmatprep.subr.mxu0 0.0
        %1355 = vmatpush1.msra.mxu0 0.0
        %1356 = vmatprep.subr.mxu0 0.0
        %1357 = vmatpush1.msra.mxu0 0.0
        %1358 = vmatprep.subr.mxu0 0.0
        %1359 = vmatpush1.msra.mxu0 0.0
        %1360 = vmatprep.subr.mxu0 0.0
        %1361 = vmatpush1.msra.mxu0 0.0
        %1362 = vmatprep.subr.mxu0 0.0
        %1363 = vmatpush1.msra.mxu0 0.0
        %1364 = vmatprep.subr.mxu0 0.0
        %1365 = vmatpush1.msra.mxu0 0.0
        %1366 = vmatprep.subr.mxu0 0.0
        %1367 = vmatpush1.msra.mxu0 0.0
        %1368 = vmatprep.subr.mxu0 0.0
        %1369 = vmatpush1.msra.mxu0 0.0
        %1370 = vmatprep.mubr.f32.mxu0 0.0
        %1371 = vmatmul.mubr.f32.gmra.mrb[0].mxu0 %v1304
        %v1372 = vpop.f32.mrb[0].mxu0
        %v1373 = vadd.f32 0.0, %v1372
        %v1374 = vpop.f32.mrb[0].mxu0
        %1375 = vdwg.mxu0
        %v1376 = vadd.f32 %v1135, %v1373
        %1377 = vrot.lane.b32.xlu0 %v647, 80
        %v1378 = vpop.permute.xlu0 %1377
        %1379 = vrot.lane.b32.xlu0 %v654, 80
        %v1380 = vpop.permute.xlu0 %1379
        %v1381 = vsel %vm656, %v1378, 0
        %v1383 = vsel %vm656, %v1380, 0
        %1385 = vmatprep.subr.mxu0 0.0
        %1386 = vmatpush1.xpose.msra.mxu0 %v1383
        %1387 = vmatprep.subr.mxu0 0.0
        %1388 = vmatpush1.xpose.msra.mxu0 0.0
        %1389 = vmatprep.subr.mxu0 0.0
        %1390 = vmatpush1.xpose.msra.mxu0 0.0
        %1391 = vmatprep.subr.mxu0 0.0
        %1392 = vmatpush1.xpose.msra.mxu0 0.0
        %1393 = vmatprep.subr.mxu0 0.0
        %1394 = vmatpush1.xpose.msra.mxu0 0.0
        %1395 = vmatprep.subr.mxu0 0.0
        %1396 = vmatpush1.xpose.msra.mxu0 0.0
        %1397 = vmatprep.subr.mxu0 0.0
        %1398 = vmatpush1.xpose.msra.mxu0 0.0
        %1399 = vmatprep.subr.mxu0 0.0
        %1400 = vmatpush1.xpose.msra.mxu0 0.0
        %1401 = vmatprep.subr.mxu0 0.0
        %1402 = vmatpush1.xpose.msra.mxu0 0.0
        %1403 = vmatprep.subr.mxu0 0.0
        %1404 = vmatpush1.xpose.msra.mxu0 0.0
        %1405 = vmatprep.subr.mxu0 0.0
        %1406 = vmatpush1.xpose.msra.mxu0 0.0
        %1407 = vmatprep.subr.mxu0 0.0
        %1408 = vmatpush1.xpose.msra.mxu0 0.0
        %1409 = vmatprep.subr.mxu0 0.0
        %1410 = vmatpush1.xpose.msra.mxu0 0.0
        %1411 = vmatprep.subr.mxu0 0.0
        %1412 = vmatpush1.xpose.msra.mxu0 0.0
        %1413 = vmatprep.subr.mxu0 0.0
        %1414 = vmatpush1.xpose.msra.mxu0 0.0
        %1415 = vmatprep.subr.mxu0 0.0
        %1416 = vmatpush1.xpose.msra.mxu0 0.0
        %1417 = vmatprep.subr.mxu0 0.0
        %1418 = vmatpush1.xpose.msra.mxu0 0.0
        %1419 = vmatprep.subr.mxu0 0.0
        %1420 = vmatpush1.xpose.msra.mxu0 0.0
        %1421 = vmatprep.subr.mxu0 0.0
        %1422 = vmatpush1.xpose.msra.mxu0 0.0
        %1423 = vmatprep.subr.mxu0 0.0
        %1424 = vmatpush1.xpose.msra.mxu0 0.0
        %1425 = vmatprep.subr.mxu0 0.0
        %1426 = vmatpush1.xpose.msra.mxu0 0.0
        %1427 = vmatprep.subr.mxu0 0.0
        %1428 = vmatpush1.xpose.msra.mxu0 0.0
        %1429 = vmatprep.subr.mxu0 0.0
        %1430 = vmatpush1.xpose.msra.mxu0 0.0
        %1431 = vmatprep.subr.mxu0 0.0
        %1432 = vmatpush1.xpose.msra.mxu0 0.0
        %1433 = vmatprep.subr.mxu0 0.0
        %1434 = vmatpush1.xpose.msra.mxu0 0.0
        %1435 = vmatprep.subr.mxu0 0.0
        %1436 = vmatpush1.xpose.msra.mxu0 0.0
        %1437 = vmatprep.subr.mxu0 0.0
        %1438 = vmatpush1.xpose.msra.mxu0 0.0
        %1439 = vmatprep.subr.mxu0 0.0
        %1440 = vmatpush1.xpose.msra.mxu0 0.0
        %1441 = vmatprep.subr.mxu0 0.0
        %1442 = vmatpush1.xpose.msra.mxu0 0.0
        %1443 = vmatprep.subr.mxu0 0.0
        %1444 = vmatpush1.xpose.msra.mxu0 0.0
        %1445 = vmatprep.subr.mxu0 0.0
        %1446 = vmatpush1.xpose.msra.mxu0 0.0
        %1447 = vmatprep.subr.mxu0 0.0
        %1448 = vmatpush1.xpose.msra.mxu0 0.0
        %1449 = vmatprep.mubr.f32.mxu0 0.0
        %1450 = vmatmul.mubr.f32.gmra.mrb[0].mxu0 %v1381
        %v1451 = vpop.f32.mrb[0].mxu0
        %v1452 = vadd.f32 %v655, %v1451
        %v1453 = vpop.f32.mrb[0].mxu0
        %1454 = vdwg.mxu0
        %v1455 = vsel %vm733, %v1452, -inf
        %1456 = vmax.xlane.f32.xlu0 %v1455
        %v1457 = vpop.xlane.xlu0 %1456
        %v1458 = vsub.f32 %v1452, %v1457
        %v1459 = vmul.f32 %v1458, 1.442695
        %v1460 = vpow.pop %v1459
        %v1461 = vsel %vm733, %v1460, 0.0
        %1462 = vadd.xlane.f32.xlu0 %v1461
        %v1463 = vpop.xlane.xlu0 %1462
        %v1464 = vrcp.pop %v1463
        %v1465 = vmul.f32 %v1460, %v1464
        %1466 = vrot.lane.b32.xlu0 %v632, 80
        %v1467 = vpop.permute.xlu0 %1466
        %v1470 = vsel %vm733, %v1465, 0
        %1472 = vmatprep.subr.mxu0 0.0
        %1473 = vmatpush1.msra.mxu0 %v1467
        %1474 = vmatprep.subr.mxu0 0.0
        %1475 = vmatpush1.msra.mxu0 0.0
        %1476 = vmatprep.subr.mxu0 0.0
        %1477 = vmatpush1.msra.mxu0 0.0
        %1478 = vmatprep.subr.mxu0 0.0
        %1479 = vmatpush1.msra.mxu0 0.0
        %1480 = vmatprep.subr.mxu0 0.0
        %1481 = vmatpush1.msra.mxu0 0.0
        %1482 = vmatprep.subr.mxu0 0.0
        %1483 = vmatpush1.msra.mxu0 0.0
        %1484 = vmatprep.subr.mxu0 0.0
        %1485 = vmatpush1.msra.mxu0 0.0
        %1486 = vmatprep.subr.mxu0 0.0
        %1487 = vmatpush1.msra.mxu0 0.0
        %1488 = vmatprep.subr.mxu0 0.0
        %1489 = vmatpush1.msra.mxu0 0.0
        %1490 = vmatprep.subr.mxu0 0.0
        %1491 = vmatpush1.msra.mxu0 0.0
        %1492 = vmatprep.subr.mxu0 0.0
        %1493 = vmatpush1.msra.mxu0 0.0
        %1494 = vmatprep.subr.mxu0 0.0
        %1495 = vmatpush1.msra.mxu0 0.0
        %1496 = vmatprep.subr.mxu0 0.0
        %1497 = vmatpush1.msra.mxu0 0.0
        %1498 = vmatprep.subr.mxu0 0.0
        %1499 = vmatpush1.msra.mxu0 0.0
        %1500 = vmatprep.subr.mxu0 0.0
        %1501 = vmatpush1.msra.mxu0 0.0
        %1502 = vmatprep.subr.mxu0 0.0
        %1503 = vmatpush1.msra.mxu0 0.0
        %1504 = vmatprep.subr.mxu0 0.0
        %1505 = vmatpush1.msra.mxu0 0.0
        %1506 = vmatprep.subr.mxu0 0.0
        %1507 = vmatpush1.msra.mxu0 0.0
        %1508 = vmatprep.subr.mxu0 0.0
        %1509 = vmatpush1.msra.mxu0 0.0
        %1510 = vmatprep.subr.mxu0 0.0
        %1511 = vmatpush1.msra.mxu0 0.0
        %1512 = vmatprep.subr.mxu0 0.0
        %1513 = vmatpush1.msra.mxu0 0.0
        %1514 = vmatprep.subr.mxu0 0.0
        %1515 = vmatpush1.msra.mxu0 0.0
        %1516 = vmatprep.subr.mxu0 0.0
        %1517 = vmatpush1.msra.mxu0 0.0
        %1518 = vmatprep.subr.mxu0 0.0
        %1519 = vmatpush1.msra.mxu0 0.0
        %1520 = vmatprep.subr.mxu0 0.0
        %1521 = vmatpush1.msra.mxu0 0.0
        %1522 = vmatprep.subr.mxu0 0.0
        %1523 = vmatpush1.msra.mxu0 0.0
        %1524 = vmatprep.subr.mxu0 0.0
        %1525 = vmatpush1.msra.mxu0 0.0
        %1526 = vmatprep.subr.mxu0 0.0
        %1527 = vmatpush1.msra.mxu0 0.0
        %1528 = vmatprep.subr.mxu0 0.0
        %1529 = vmatpush1.msra.mxu0 0.0
        %1530 = vmatprep.subr.mxu0 0.0
        %1531 = vmatpush1.msra.mxu0 0.0
        %1532 = vmatprep.subr.mxu0 0.0
        %1533 = vmatpush1.msra.mxu0 0.0
        %1534 = vmatprep.subr.mxu0 0.0
        %1535 = vmatpush1.msra.mxu0 0.0
        %1536 = vmatprep.mubr.f32.mxu0 0.0
        %1537 = vmatmul.mubr.f32.gmra.mrb[0].mxu0 %v1470
        %v1538 = vpop.f32.mrb[0].mxu0
        %v1539 = vadd.f32 0.0, %v1538
        %v1540 = vpop.f32.mrb[0].mxu0
        %1541 = vdwg.mxu0
        %v1542 = vld [vmem:[%s4 + $0x30] sm:$0xff]
        %v1543 = vld [vmem:[%s4 + $0x38] sm:$0xff]
        %v1545 = vsel %vm656, %v1539, 0
        %1547 = vmatprep.subr.mxu0 0.0
        %1548 = vmatpush1.msra.mxu0 %v1542
        %1549 = vmatprep.subr.mxu0 0.0
        %1550 = vmatpush1.msra.mxu0 %v1543
        %1551 = vmatprep.subr.mxu0 0.0
        %1552 = vmatpush1.msra.mxu0 0.0
        %1553 = vmatprep.subr.mxu0 0.0
        %1554 = vmatpush1.msra.mxu0 0.0
        %1555 = vmatprep.subr.mxu0 0.0
        %1556 = vmatpush1.msra.mxu0 0.0
        %1557 = vmatprep.subr.mxu0 0.0
        %1558 = vmatpush1.msra.mxu0 0.0
        %1559 = vmatprep.subr.mxu0 0.0
        %1560 = vmatpush1.msra.mxu0 0.0
        %1561 = vmatprep.subr.mxu0 0.0
        %1562 = vmatpush1.msra.mxu0 0.0
        %1563 = vmatprep.subr.mxu0 0.0
        %1564 = vmatpush1.msra.mxu0 0.0
        %1565 = vmatprep.subr.mxu0 0.0
        %1566 = vmatpush1.msra.mxu0 0.0
        %1567 = vmatprep.subr.mxu0 0.0
        %1568 = vmatpush1.msra.mxu0 0.0
        %1569 = vmatprep.subr.mxu0 0.0
        %1570 = vmatpush1.msra.mxu0 0.0
        %1571 = vmatprep.subr.mxu0 0.0
        %1572 = vmatpush1.msra.mxu0 0.0
        %1573 = vmatprep.subr.mxu0 0.0
        %1574 = vmatpush1.msra.mxu0 0.0
        %1575 = vmatprep.subr.mxu0 0.0
        %1576 = vmatpush1.msra.mxu0 0.0
        %1577 = vmatprep.subr.mxu0 0.0
        %1578 = vmatpush1.msra.mxu0 0.0
        %1579 = vmatprep.subr.mxu0 0.0
        %1580 = vmatpush1.msra.mxu0 0.0
        %1581 = vmatprep.subr.mxu0 0.0
        %1582 = vmatpush1.msra.mxu0 0.0
        %1583 = vmatprep.subr.mxu0 0.0
        %1584 = vmatpush1.msra.mxu0 0.0
        %1585 = vmatprep.subr.mxu0 0.0
        %1586 = vmatpush1.msra.mxu0 0.0
        %1587 = vmatprep.subr.mxu0 0.0
        %1588 = vmatpush1.msra.mxu0 0.0
        %1589 = vmatprep.subr.mxu0 0.0
        %1590 = vmatpush1.msra.mxu0 0.0
        %1591 = vmatprep.subr.mxu0 0.0
        %1592 = vmatpush1.msra.mxu0 0.0
        %1593 = vmatprep.subr.mxu0 0.0
        %1594 = vmatpush1.msra.mxu0 0.0
        %1595 = vmatprep.subr.mxu0 0.0
        %1596 = vmatpush1.msra.mxu0 0.0
        %1597 = vmatprep.subr.mxu0 0.0
        %1598 = vmatpush1.msra.mxu0 0.0
        %1599 = vmatprep.subr.mxu0 0.0
        %1600 = vmatpush1.msra.mxu0 0.0
        %1601 = vmatprep.subr.mxu0 0.0
        %1602 = vmatpush1.msra.mxu0 0.0
        %1603 = vmatprep.subr.mxu0 0.0
        %1604 = vmatpush1.msra.mxu0 0.0
        %1605 = vmatprep.subr.mxu0 0.0
        %1606 = vmatpush1.msra.mxu0 0.0
        %1607 = vmatprep.subr.mxu0 0.0
        %1608 = vmatpush1.msra.mxu0 0.0
        %1609 = vmatprep.subr.mxu0 0.0
        %1610 = vmatpush1.msra.mxu0 0.0
        %1611 = vmatprep.mubr.f32.mxu0 0.0
        %1612 = vmatmul.mubr.f32.gmra.mrb[0].mxu0 %v1545
        %v1613 = vpop.f32.mrb[0].mxu0
        %v1614 = vadd.f32 0.0, %v1613
        %v1615 = vpop.f32.mrb[0].mxu0
        %1616 = vdwg.mxu0
        %v1617 = vadd.f32 %v1376, %v1614
        %v1618 = vmul.f32 %v1617, %v1617
        %v1619 = vsel %vm462, %v1618, 0.0
        %1620 = vadd.xlane.f32.xlu0 %v1619
        %v1621 = vpop.xlane.xlu0 %1620
        %v1622 = vmul.f32 %v1621, %v466
        %v1623 = vadd.f32 %v1622, 1e-06
        %v1624 = vrsqrt.pop %v1623
        %v1625 = vmul.f32 %v1617, %v1624
        %v1626 = vld [vmem:[%s2] sm:$0x1]
        %v1628 = vlaneseq
        %v1629 = vshrl.u32 %v1628, 7
        %v1630 = vsub.s32 0, %v1629
        %v1631 = vrot.slane %v1626, %v1630
        %v1633 = vmul.f32 %v1625, %v1631
        %v1634 = vld [vmem:[%s5] sm:$0xff]
        %v1635 = vld [vmem:[%s5 + $0x8] sm:$0xff]
        %v1636 = vld [vmem:[%s5 + $0x10] sm:$0xff]
        %v1637 = vld [vmem:[%s5 + $0x18] sm:$0xff]
        %v1638 = vld [vmem:[%s6] sm:$0x1]
        %v1640 = vlaneseq
        %v1641 = vshrl.u32 %v1640, 7
        %v1642 = vsub.s32 0, %v1641
        %v1643 = vrot.slane %v1638, %v1642
        %v1646 = vsel %vm462, %v1633, 0
        %1648 = vmatprep.subr.mxu0 0.0
        %1649 = vmatpush1.msra.mxu0 %v1634
        %1650 = vmatprep.subr.mxu0 0.0
        %1651 = vmatpush1.msra.mxu0 %v1635
        %1652 = vmatprep.subr.mxu0 0.0
        %1653 = vmatpush1.msra.mxu0 %v1636
        %1654 = vmatprep.subr.mxu0 0.0
        %1655 = vmatpush1.msra.mxu0 %v1637
        %1656 = vmatprep.subr.mxu0 0.0
        %1657 = vmatpush1.msra.mxu0 0.0
        %1658 = vmatprep.subr.mxu0 0.0
        %1659 = vmatpush1.msra.mxu0 0.0
        %1660 = vmatprep.subr.mxu0 0.0
        %1661 = vmatpush1.msra.mxu0 0.0
        %1662 = vmatprep.subr.mxu0 0.0
        %1663 = vmatpush1.msra.mxu0 0.0
        %1664 = vmatprep.subr.mxu0 0.0
        %1665 = vmatpush1.msra.mxu0 0.0
        %1666 = vmatprep.subr.mxu0 0.0
        %1667 = vmatpush1.msra.mxu0 0.0
        %1668 = vmatprep.subr.mxu0 0.0
        %1669 = vmatpush1.msra.mxu0 0.0
        %1670 = vmatprep.subr.mxu0 0.0
        %1671 = vmatpush1.msra.mxu0 0.0
        %1672 = vmatprep.subr.mxu0 0.0
        %1673 = vmatpush1.msra.mxu0 0.0
        %1674 = vmatprep.subr.mxu0 0.0
        %1675 = vmatpush1.msra.mxu0 0.0
        %1676 = vmatprep.subr.mxu0 0.0
        %1677 = vmatpush1.msra.mxu0 0.0
        %1678 = vmatprep.subr.mxu0 0.0
        %1679 = vmatpush1.msra.mxu0 0.0
        %1680 = vmatprep.subr.mxu0 0.0
        %1681 = vmatpush1.msra.mxu0 0.0
        %1682 = vmatprep.subr.mxu0 0.0
        %1683 = vmatpush1.msra.mxu0 0.0
        %1684 = vmatprep.subr.mxu0 0.0
        %1685 = vmatpush1.msra.mxu0 0.0
        %1686 = vmatprep.subr.mxu0 0.0
        %1687 = vmatpush1.msra.mxu0 0.0
        %1688 = vmatprep.subr.mxu0 0.0
        %1689 = vmatpush1.msra.mxu0 0.0
        %1690 = vmatprep.subr.mxu0 0.0
        %1691 = vmatpush1.msra.mxu0 0.0
        %1692 = vmatprep.subr.mxu0 0.0
        %1693 = vmatpush1.msra.mxu0 0.0
        %1694 = vmatprep.subr.mxu0 0.0
        %1695 = vmatpush1.msra.mxu0 0.0
        %1696 = vmatprep.subr.mxu0 0.0
        %1697 = vmatpush1.msra.mxu0 0.0
        %1698 = vmatprep.subr.mxu0 0.0
        %1699 = vmatpush1.msra.mxu0 0.0
        %1700 = vmatprep.subr.mxu0 0.0
        %1701 = vmatpush1.msra.mxu0 0.0
        %1702 = vmatprep.subr.mxu0 0.0
        %1703 = vmatpush1.msra.mxu0 0.0
        %1704 = vmatprep.subr.mxu0 0.0
        %1705 = vmatpush1.msra.mxu0 0.0
        %1706 = vmatprep.subr.mxu0 0.0
        %1707 = vmatpush1.msra.mxu0 0.0
        %1708 = vmatprep.subr.mxu0 0.0
        %1709 = vmatpush1.msra.mxu0 0.0
        %1710 = vmatprep.subr.mxu0 0.0
        %1711 = vmatpush1.msra.mxu0 0.0
        %1712 = vmatprep.mubr.f32.mxu0 0.0
        %1713 = vmatmul.mubr.f32.gmra.mrb[0].mxu0 %v1646
        %v1714 = vpop.f32.mrb[0].mxu0
        %v1715 = vadd.f32 %v1643, %v1714
        %v1716 = vpop.f32.mrb[0].mxu0
        %1717 = vdwg.mxu0
        %v1718 = vmul.f32 %v1715, 0.5
        %v1719 = vmul.f32 %v1715, 0.044715
        %v1720 = vmul.f32 %v1719, %v1715
        %v1721 = vmul.f32 %v1720, %v1715
        %v1722 = vadd.f32 %v1715, %v1721
        %v1723 = vmul.f32 %v1722, 0.7978846
        %v1724 = vtanh.pop %v1723
        %v1725 = vadd.f32 %v1724, 1.0
        %v1726 = vmul.f32 %v1718, %v1725
        %1728 = vrot.lane.b32.xlu0 %v1715, 64
        %v1729 = vpop.permute.xlu0 %1728
        %v1731 = vmul.f32 %v1726, %v1729
        %v1732 = vld [vmem:[%s7] sm:$0xff]
        %v1733 = vld [vmem:[%s7 + $0x8] sm:$0xff]
        %v1734 = vld [vmem:[%s7 + $0x10] sm:$0xff]
        %v1735 = vld [vmem:[%s7 + $0x18] sm:$0xff]
        %v1736 = vld [vmem:[%s7 + $0x20] sm:$0xff]
        %v1737 = vld [vmem:[%s7 + $0x28] sm:$0xff]
        %v1738 = vld [vmem:[%s7 + $0x30] sm:$0xff]
        %v1739 = vld [vmem:[%s7 + $0x38] sm:$0xff]
        %v1740 = vld [vmem:[%s8] sm:$0x1]
        %v1742 = vlaneseq
        %v1743 = vshrl.u32 %v1742, 7
        %v1744 = vsub.s32 0, %v1743
        %v1745 = vrot.slane %v1740, %v1744
        %vm1747 = vcmask 523264
        %v1749 = vsel %vm1747, %v1731, 0
        %1751 = vmatprep.subr.mxu0 0.0
        %1752 = vmatpush1.msra.mxu0 %v1732
        %1753 = vmatprep.subr.mxu0 0.0
        %1754 = vmatpush1.msra.mxu0 %v1733
        %1755 = vmatprep.subr.mxu0 0.0
        %1756 = vmatpush1.msra.mxu0 %v1734
        %1757 = vmatprep.subr.mxu0 0.0
        %1758 = vmatpush1.msra.mxu0 %v1735
        %1759 = vmatprep.subr.mxu0 0.0
        %1760 = vmatpush1.msra.mxu0 %v1736
        %1761 = vmatprep.subr.mxu0 0.0
        %1762 = vmatpush1.msra.mxu0 %v1737
        %1763 = vmatprep.subr.mxu0 0.0
        %1764 = vmatpush1.msra.mxu0 %v1738
        %1765 = vmatprep.subr.mxu0 0.0
        %1766 = vmatpush1.msra.mxu0 %v1739
        %1767 = vmatprep.subr.mxu0 0.0
        %1768 = vmatpush1.msra.mxu0 0.0
        %1769 = vmatprep.subr.mxu0 0.0
        %1770 = vmatpush1.msra.mxu0 0.0
        %1771 = vmatprep.subr.mxu0 0.0
        %1772 = vmatpush1.msra.mxu0 0.0
        %1773 = vmatprep.subr.mxu0 0.0
        %1774 = vmatpush1.msra.mxu0 0.0
        %1775 = vmatprep.subr.mxu0 0.0
        %1776 = vmatpush1.msra.mxu0 0.0
        %1777 = vmatprep.subr.mxu0 0.0
        %1778 = vmatpush1.msra.mxu0 0.0
        %1779 = vmatprep.subr.mxu0 0.0
        %1780 = vmatpush1.msra.mxu0 0.0
        %1781 = vmatprep.subr.mxu0 0.0
        %1782 = vmatpush1.msra.mxu0 0.0
        %1783 = vmatprep.subr.mxu0 0.0
        %1784 = vmatpush1.msra.mxu0 0.0
        %1785 = vmatprep.subr.mxu0 0.0
        %1786 = vmatpush1.msra.mxu0 0.0
        %1787 = vmatprep.subr.mxu0 0.0
        %1788 = vmatpush1.msra.mxu0 0.0
        %1789 = vmatprep.subr.mxu0 0.0
        %1790 = vmatpush1.msra.mxu0 0.0
        %1791 = vmatprep.subr.mxu0 0.0
        %1792 = vmatpush1.msra.mxu0 0.0
        %1793 = vmatprep.subr.mxu0 0.0
        %1794 = vmatpush1.msra.mxu0 0.0
        %1795 = vmatprep.subr.mxu0 0.0
        %1796 = vmatpush1.msra.mxu0 0.0
        %1797 = vmatprep.subr.mxu0 0.0
        %1798 = vmatpush1.msra.mxu0 0.0
        %1799 = vmatprep.subr.mxu0 0.0
        %1800 = vmatpush1.msra.mxu0 0.0
        %1801 = vmatprep.subr.mxu0 0.0
        %1802 = vmatpush1.msra.mxu0 0.0
        %1803 = vmatprep.subr.mxu0 0.0
        %1804 = vmatpush1.msra.mxu0 0.0
        %1805 = vmatprep.subr.mxu0 0.0
        %1806 = vmatpush1.msra.mxu0 0.0
        %1807 = vmatprep.subr.mxu0 0.0
        %1808 = vmatpush1.msra.mxu0 0.0
        %1809 = vmatprep.subr.mxu0 0.0
        %1810 = vmatpush1.msra.mxu0 0.0
        %1811 = vmatprep.subr.mxu0 0.0
        %1812 = vmatpush1.msra.mxu0 0.0
        %1813 = vmatprep.subr.mxu0 0.0
        %1814 = vmatpush1.msra.mxu0 0.0
        %1815 = vmatprep.mubr.f32.mxu0 0.0
        %1816 = vmatmul.mubr.f32.gmra.mrb[0].mxu0 %v1749
        %v1817 = vpop.f32.mrb[0].mxu0
        %v1818 = vadd.f32 %v1745, %v1817
        %v1819 = vpop.f32.mrb[0].mxu0
        %1820 = vdwg.mxu0
        %v1821 = vadd.f32 %v1818, %v1617
        %1822 = vst.msk [vmem:[%s443] sm:$0xff] %vm462, %v1821
        %s1823 = sand.u32 %s306, 1
        %s1824 = scalar_lea.sflag [#allocation3], %s1823
        %s1825 = sand.u32 %s306, 1
        %s1826 = smul.addr %s1825, 8
        %s1827 = scalar_lea.vmem [#allocation2], %s1826
        // Predicated region
        $region69: #{gemma_decoder_layer.1} parent=67 // pred_check
          %p1828 = pneg %p316
        $region70: #{gemma_decoder_layer.1} parent=67 // pred_check_branch
          %1830 = sbr.rel (%p1828) target = $region72
        $region71: #{gemma_decoder_layer.1} parent=67 // pred_region
          %s1832 = ssub.s32 128, 128
          %1833 = vsyncadd %s1824, %s1832
          %s1834 = smul.addr %s26, 128
          %s1835 = scalar_lea.hbm %s12, %s1834
          %s1837 = sshll.u32 %s1827, 4
          %s1838 = int_to_ptr.vmem [resolvable:$true] %s1837
          %1840 = dma.vmem_to_hbm [thread:$0]  %s1838, 128, %s1835, %s1824
        $region72: #{gemma_decoder_layer.1} parent=67 // pred_fallthru
          _
      $region68: #{gemma_decoder_layer.1} parent=5 // pred_fallthru
        _
      %p1841 = scmp.le.s32.totalorder 2, %s21
      // Predicated region
      $region73: #{gemma_decoder_layer.1} parent=5 // pred_check
        %p1842 = pneg %p1841
      $region74: #{gemma_decoder_layer.1} parent=5 // pred_check_branch
        %1844 = sbr.rel (%p1842) target = $region76
      $region75: #{gemma_decoder_layer.1} parent=5 // pred_region
        %s1845 = ssub.s32 %s21, 2
        // Predicated region
        $region77: #{gemma_decoder_layer.1} parent=75 // pred_check
          %p1846 = pneg %p322
        $region78: #{gemma_decoder_layer.1} parent=75 // pred_check_branch
          %1848 = sbr.rel (%p1846) target = $region80
        $region79: #{gemma_decoder_layer.1} parent=75 // pred_region
          %s1849 = sand.u32 %s307, 1
          %s1850 = scalar_lea.sflag [#allocation3], %s1849
          %s1851 = sand.u32 %s307, 1
          %s1852 = smul.addr %s1851, 8
          %s1853 = scalar_lea.vmem [#allocation2], %s1852
          %1854 = dma.done %s1850, 128
        $region80: #{gemma_decoder_layer.1} parent=75 // pred_fallthru
          _
      $region76: #{gemma_decoder_layer.1} parent=5 // pred_fallthru
        _
    $region6: #{gemma_decoder_layer.1} parent=1 // loop_footer
      %s25 = sadd.s32 1, %s21
    $region7: #{gemma_decoder_layer.1} parent=1 // loop_footer_branch
      %20 = sbr.rel target = $region3
    $region8: #{gemma_decoder_layer.1} parent=1 // loop_exit
      _
    %1855 = vsyncpa [#allocation3], 1
    %s1856 = scalar_lea.sflag [#allocation3], 1
    %1857 = vsyncpa %s1856, 1

</llo_original>
